<compile_context>
chip_gen: v7x
topology: tpu7x:2x2x1
jax: 0.10.0
libtpu: 0.0.40
codegen_flags: <defaults>
</compile_context>

<pallas_src>
import jax
import jax.numpy as jnp
from jax.experimental import pallas as pl
from jax.experimental.pallas import tpu as pltpu


# ----------------------------------------------------------------------------- kernel
def _repvggdw_kernel(x_ref, w_ref, b_ref, o_ref, xpad_ref):
    """Fused depthwise 7x7 (with merged 3x3 branch) + bias + SiLU, channels-last.

    x_ref:    (1, H, W, Cb)   input block (channels on the 128-lane axis)
    w_ref:    (49, Cb)        merged depthwise taps (index = kh*7 + kw)
    b_ref:    (1, Cb)         merged per-channel bias, f32
    o_ref:    (1, H, W, Cb)   output block
    xpad_ref: (H+6, W+6, Cb)  VMEM scratch: zero-padded input tile
    """
    _, H, W, Cb = o_ref.shape
    cdt = xpad_ref.dtype

    # --- 'same' padding in VMEM: zero only the halo strips (top/bottom/left/right),
    #     then copy the interior row-by-row so live ranges stay bounded. ---
    xpad_ref[0:3, :, :] = jnp.zeros((3, W + 6, Cb), cdt)
    xpad_ref[3 + H:3 + H + 3, :, :] = jnp.zeros((3, W + 6, Cb), cdt)
    xpad_ref[3:3 + H, 0:3, :] = jnp.zeros((H, 3, Cb), cdt)
    xpad_ref[3:3 + H, 3 + W:3 + W + 3, :] = jnp.zeros((H, 3, Cb), cdt)

    def copy_row(h, carry):
        xpad_ref[3 + h, pl.ds(3, W), :] = x_ref[0, h, :, :].astype(cdt)
        return carry

    jax.lax.fori_loop(0, H, copy_row, 0)

    # Bias broadcast hoisted out of the row loop (loop-invariant, a couple of vregs).
    bias_row = jnp.broadcast_to(b_ref[0, :].astype(jnp.float32), (W, Cb))

    # --- Depthwise 7x7, one output row at a time.  Every kh/kw shift is a plain
    #     VMEM row/sublane address offset; the per-tap weight is a lane vector. ---
    def row_body(h, carry):
        acc = bias_row
        for kh in range(7):
            for kw in range(7):
                slab = xpad_ref[h + kh, pl.ds(kw, W), :]        # (W, Cb)
                acc = acc + slab * w_ref[kh * 7 + kw, :]        # f32 accumulate
        y = acc * jax.nn.sigmoid(acc)                           # SiLU
        o_ref[0, h, :, :] = y.astype(o_ref.dtype)               # lane-dense store
        return carry

    jax.lax.fori_loop(0, H, row_body, 0)


# ----------------------------------------------------------------------------- glue
def _fold_bn(w, gamma, beta, mean, var, eps=1e-5):
    # w: (C, 1, k, k) depthwise conv weight (PyTorch layout), eval-mode BN folding.
    scale = gamma / jnp.sqrt(var + eps)                       # (C,)
    w_eff = w[:, 0, :, :] * scale[:, None, None]              # (C, k, k)
    b_eff = beta - mean * scale                               # (C,)
    return w_eff, b_eff


def _round_up(v, m):
    return ((v + m - 1) // m) * m


def _phys_bytes(shape, itemsize):
    """Bytes a VMEM buffer actually occupies: last dim padded to 128 lanes,
    second-to-last padded to a sublane tile (8 rows for 4B, 16 for 2B, ...)."""
    sub = 8 * max(1, 4 // max(1, itemsize))
    lead = 1
    for d in shape[:-2]:
        lead *= d
    rows = _round_up(shape[-2], sub)
    lanes = _round_up(shape[-1], 128)
    return lead * rows * lanes * itemsize


def _block_footprint(H, W, cb, x_itemsize, cdt_itemsize):
    io = _phys_bytes((H, W, cb), x_itemsize)              # one in OR out block
    wgt = _phys_bytes((49, cb), cdt_itemsize)
    bia = _phys_bytes((1, cb), 4)
    pad = _phys_bytes((H + 6, W + 6, cb), cdt_itemsize)   # scratch (single-buffered)
    # in + out blocks double-buffered, weights/bias double-buffered, scratch once.
    return 2 * 2 * io + 2 * (wgt + bia) + pad


def _vmem_plan():
    cap = 128 * 1024 * 1024
    try:
        info = pltpu.get_tpu_info()
        cap = int(getattr(info, "vmem_capacity_bytes", cap)) or cap
    except Exception:
        pass
    budget = cap // 2          # sizing budget for picking the channel block
    return cap, budget


def _choose_c_block(C, H, W, x_itemsize, cdt_itemsize, budget_bytes):
    """Channel block: either full C or a multiple of 128 dividing C (lane-dense)."""
    cands = {C}
    m = 128
    while m < C:
        if C % m == 0:
            cands.add(m)
        m += 128
    cands = sorted(cands)

    def vmem_ok(cb):
        return _block_footprint(H, W, cb, x_itemsize, cdt_itemsize) <= budget_bytes

    def vreg_ok(cb):
        # keep the per-row f32 accumulator (W, cb) at <= 16 vregs
        return W * _round_up(cb, 128) * 4 <= 16 * 4096

    good = [c for c in cands if vmem_ok(c) and vreg_ok(c)]
    if good:
        return max(good)
    fallback = [c for c in cands if vmem_ok(c)] or cands
    return min(fallback)


def repvggdw_forward(x, params, eps=1e-5):
    """x: (N, C, H, W).  params: w7,g7,b7,m7,v7 (7x7 branch) and w3,g3,b3,m3,v3 (3x3)."""
    N, C, H, W = x.shape

    # --- fold BN and merge branches into one 7x7 depthwise conv + bias (JAX glue) ---
    w7_eff, b7_eff = _fold_bn(params["w7"], params["g7"], params["b7"],
                              params["m7"], params["v7"], eps)
    w3_eff, b3_eff = _fold_bn(params["w3"], params["g3"], params["b3"],
                              params["m3"], params["v3"], eps)
    w_comb = w7_eff + jnp.pad(w3_eff, ((0, 0), (2, 2), (2, 2)))       # (C, 7, 7)
    bias = (b7_eff + b3_eff).reshape(1, C).astype(jnp.float32)        # (1, C)

    # bf16 taps on bf16 activations (v6e/v7x VALU packs 16x128); f32 otherwise.
    cdt = jnp.bfloat16 if x.dtype == jnp.bfloat16 else jnp.float32
    # Tap-major, channels-last weight layout: (49, C), tap index = kh*7 + kw.
    w_taps = jnp.transpose(w_comb.reshape(C, 49), (1, 0)).astype(cdt)

    # One-time wrapper transpose: channels-last so C sits on the lane axis.
    x_nhwc = jnp.transpose(x, (0, 2, 3, 1))

    cap, budget = _vmem_plan()
    cdt_isz = jnp.dtype(cdt).itemsize
    cb = _choose_c_block(C, H, W, x.dtype.itemsize, cdt_isz, budget)
    need = _block_footprint(H, W, cb, x.dtype.itemsize, cdt_isz)
    vmem_limit = int(min(max(need + (8 << 20), 32 << 20), int(cap * 0.625)))

    grid = (N, C // cb)
    out_nhwc = pl.pallas_call(
        _repvggdw_kernel,
        out_shape=jax.ShapeDtypeStruct((N, H, W, C), x.dtype),
        grid=grid,
        in_specs=[
            pl.BlockSpec((1, H, W, cb), lambda n, ci: (n, 0, 0, ci)),
            pl.BlockSpec((49, cb), lambda n, ci: (0, ci)),
            pl.BlockSpec((1, cb), lambda n, ci: (0, ci)),
        ],
        out_specs=pl.BlockSpec((1, H, W, cb), lambda n, ci: (n, 0, 0, ci)),
        scratch_shapes=[pltpu.VMEM((H + 6, W + 6, cb), cdt)],
        compiler_params=pltpu.CompilerParams(
            dimension_semantics=("parallel", "parallel"),
            vmem_limit_bytes=vmem_limit,
        ),
    )(x_nhwc, w_taps, bias)
    return jnp.transpose(out_nhwc, (0, 3, 1, 2))


# ----------------------------------------------------------------------------- reference
def _reference(x_nchw, params, eps=1e-5):
    """Pure-JAX reference matching the PyTorch forward (eval-mode BN)."""
    x = jnp.transpose(x_nchw, (0, 2, 3, 1))
    C = x.shape[-1]

    def dwconv(xx, w, k):
        wk = jnp.transpose(w, (2, 3, 1, 0))  # (C,1,k,k) -> (k,k,1,C) HWIO
        return jax.lax.conv_general_dilated(
            xx, wk, (1, 1), [(k // 2, k // 2)] * 2,
            dimension_numbers=("NHWC", "HWIO", "NHWC"),
            feature_group_count=C)

    def bn(y, g, b, m, v):
        return (y - m) / jnp.sqrt(v + eps) * g + b

    y7 = bn(dwconv(x, params["w7"], 7), params["g7"], params["b7"], params["m7"], params["v7"])
    y3 = bn(dwconv(x, params["w3"], 3), params["g3"], params["b3"], params["m3"], params["v3"])
    y = y7 + y3
    y = y * jax.nn.sigmoid(y)
    return jnp.transpose(y, (0, 3, 1, 2))


if __name__ == "__main__":
    key = jax.random.PRNGKey(0)
    N, C, H, W = 2, 4, 16, 16  # ed = C = 4

    keys = jax.random.split(key, 8)
    x = jax.random.normal(keys[0], (N, C, H, W), jnp.float32)

    params = {
        # 7x7 depthwise branch: Conv2d(ed, ed, 7, groups=ed, bias=False) + BN
        "w7": jax.random.normal(keys[1], (C, 1, 7, 7), jnp.float32) * 0.1,
        "g7": 1.0 + 0.1 * jax.random.normal(keys[2], (C,), jnp.float32),
        "b7": 0.1 * jax.random.normal(keys[3], (C,), jnp.float32),
        "m7": 0.05 * jax.random.normal(keys[4], (C,), jnp.float32),
        "v7": jnp.abs(1.0 + 0.1 * jax.random.normal(keys[5], (C,), jnp.float32)),
        # 3x3 depthwise branch: Conv2d(ed, ed, 3, groups=ed, bias=False) + BN
        "w3": jax.random.normal(keys[6], (C, 1, 3, 3), jnp.float32) * 0.1,
        "g3": jnp.ones((C,), jnp.float32),
        "b3": jnp.zeros((C,), jnp.float32),
        "m3": jnp.zeros((C,), jnp.float32),
        "v3": jnp.ones((C,), jnp.float32),
    }

    out = repvggdw_forward(x, params)
    out = jax.block_until_ready(out)

    ref = _reference(x, params)
    assert out.shape == (N, C, H, W)
    assert jnp.allclose(out, ref, atol=1e-4, rtol=1e-4), "mismatch vs reference"

    print("KERNEL_OK")
</pallas_src>

<mosaic_0001>
module attributes {stable_mosaic.version = 11 : i64} {
  func.func @_repvggdw_kernel(%arg0: i32, %arg1: i32, %arg2: memref<1x16x16x4xf32, #tpu.memory_space<vmem>>, %arg3: memref<49x4xf32, #tpu.memory_space<vmem>>, %arg4: memref<1x4xf32, #tpu.memory_space<vmem>>, %arg5: memref<1x16x16x4xf32, #tpu.memory_space<vmem>>, %arg6: memref<22x22x4xf32, #tpu.memory_space<vmem>>) attributes {dimension_semantics = [#tpu.dimension_semantics<parallel>, #tpu.dimension_semantics<parallel>], iteration_bounds = array<i64: 2, 1>, scalar_prefetch = 0 : i64, scratch_operands = 1 : i64, tpu.core_type = #tpu.core_type<tc>, window_params = [{transform_indices = @transform_0, window_bounds = array<i64: 1, 16, 16, 4>}, {transform_indices = @transform_1, window_bounds = array<i64: 49, 4>}, {transform_indices = @transform_2, window_bounds = array<i64: 1, 4>}, {transform_indices = @transform_3, window_bounds = array<i64: 1, 16, 16, 4>}]} {
    %cst = arith.constant 0.000000e+00 : f32
    %0 = vector.broadcast %cst : f32 to vector<3x22x4xf32>
    %c0 = arith.constant 0 : index
    %c0_0 = arith.constant 0 : index
    %c0_1 = arith.constant 0 : index
    %1 = vector.load %arg6[%c0, %c0_0, %c0_1] : memref<22x22x4xf32, #tpu.memory_space<vmem>>, vector<3x22x4xf32>
    tpu.vector_store %arg6[%c0, %c0_0, %c0_1], %0 {strides = array<i32>} : memref<22x22x4xf32, #tpu.memory_space<vmem>>, vector<3x22x4xf32>,
    %cst_2 = arith.constant 0.000000e+00 : f32
    %2 = vector.broadcast %cst_2 : f32 to vector<3x22x4xf32>
    %c19 = arith.constant 19 : index
    %c0_3 = arith.constant 0 : index
    %c0_4 = arith.constant 0 : index
    %3 = vector.load %arg6[%c19, %c0_3, %c0_4] : memref<22x22x4xf32, #tpu.memory_space<vmem>>, vector<3x22x4xf32>
    tpu.vector_store %arg6[%c19, %c0_3, %c0_4], %2 {strides = array<i32>} : memref<22x22x4xf32, #tpu.memory_space<vmem>>, vector<3x22x4xf32>,
    %cst_5 = arith.constant 0.000000e+00 : f32
    %4 = vector.broadcast %cst_5 : f32 to vector<16x3x4xf32>
    %c3 = arith.constant 3 : index
    %c0_6 = arith.constant 0 : index
    %c0_7 = arith.constant 0 : index
    %5 = vector.load %arg6[%c3, %c0_6, %c0_7] : memref<22x22x4xf32, #tpu.memory_space<vmem>>, vector<16x3x4xf32>
    tpu.vector_store %arg6[%c3, %c0_6, %c0_7], %4 {strides = array<i32>} : memref<22x22x4xf32, #tpu.memory_space<vmem>>, vector<16x3x4xf32>,
    %cst_8 = arith.constant 0.000000e+00 : f32
    %6 = vector.broadcast %cst_8 : f32 to vector<16x3x4xf32>
    %c3_9 = arith.constant 3 : index
    %c19_10 = arith.constant 19 : index
    %c0_11 = arith.constant 0 : index
    %7 = vector.load %arg6[%c3_9, %c19_10, %c0_11] : memref<22x22x4xf32, #tpu.memory_space<vmem>>, vector<16x3x4xf32>
    tpu.vector_store %arg6[%c3_9, %c19_10, %c0_11], %6 {strides = array<i32>} : memref<22x22x4xf32, #tpu.memory_space<vmem>>, vector<16x3x4xf32>,
    %c0_i32 = arith.constant 0 : i32
    %c16_i32 = arith.constant 16 : i32
    %8 = arith.addi %c0_i32, %c16_i32 : i32
    %c1_i32 = arith.constant 1 : i32
    scf.for %arg7 = %c0_i32 to %8 step %c1_i32  : i32 {
      %c0_19 = arith.constant 0 : index
      %14 = arith.index_cast %arg7 : i32 to index
      %c0_20 = arith.constant 0 : index
      %c0_21 = arith.constant 0 : index
      %15 = vector.load %arg2[%c0_19, %14, %c0_20, %c0_21] : memref<1x16x16x4xf32, #tpu.memory_space<vmem>>, vector<1x1x16x4xf32>
      %16 = vector.shape_cast %15 : vector<1x1x16x4xf32> to vector<16x4xf32>
      %c3_i32 = arith.constant 3 : i32
      %17 = arith.addi %c3_i32, %arg7 : i32
      %18 = arith.index_cast %17 : i32 to index
      %c3_22 = arith.constant 3 : index
      %c0_23 = arith.constant 0 : index
      %19 = vector.load %arg6[%18, %c3_22, %c0_23] : memref<22x22x4xf32, #tpu.memory_space<vmem>>, vector<1x16x4xf32>
      %20 = vector.shape_cast %19 : vector<1x16x4xf32> to vector<16x4xf32>
      %21 = vector.shape_cast %16 : vector<16x4xf32> to vector<1x16x4xf32>
      tpu.vector_store %arg6[%18, %c3_22, %c0_23], %21 {strides = array<i32>} : memref<22x22x4xf32, #tpu.memory_space<vmem>>, vector<1x16x4xf32>,
    }
    %c16_i32_12 = arith.constant 16 : i32
    %c0_13 = arith.constant 0 : index
    %c0_14 = arith.constant 0 : index
    %9 = vector.load %arg4[%c0_13, %c0_14] : memref<1x4xf32, #tpu.memory_space<vmem>>, vector<1x4xf32>
    %10 = vector.shape_cast %9 : vector<1x4xf32> to vector<4xf32>
    %11 = vector.shape_cast %10 : vector<4xf32> to vector<1x4xf32>
    %12 = vector.broadcast %11 : vector<1x4xf32> to vector<16x4xf32>
    %c0_i32_15 = arith.constant 0 : i32
    %c16_i32_16 = arith.constant 16 : i32
    %13 = arith.addi %c0_i32_15, %c16_i32_16 : i32
    %c1_i32_17 = arith.constant 1 : i32
    scf.for %arg7 = %c0_i32_15 to %13 step %c1_i32_17  : i32 {
      %c0_i32_19 = arith.constant 0 : i32
      %14 = arith.addi %arg7, %c0_i32_19 : i32
      %15 = arith.index_cast %14 : i32 to index
      %c0_20 = arith.constant 0 : index
      %c0_21 = arith.constant 0 : index
      %16 = vector.load %arg6[%15, %c0_20, %c0_21] : memref<22x22x4xf32, #tpu.memory_space<vmem>>, vector<1x16x4xf32>
      %17 = vector.shape_cast %16 : vector<1x16x4xf32> to vector<16x4xf32>
      %c0_22 = arith.constant 0 : index
      %c0_23 = arith.constant 0 : index
      %18 = vector.load %arg3[%c0_22, %c0_23] : memref<49x4xf32, #tpu.memory_space<vmem>>, vector<1x4xf32>
      %19 = vector.shape_cast %18 : vector<1x4xf32> to vector<4xf32>
      %20 = vector.shape_cast %19 : vector<4xf32> to vector<1x4xf32>
      %21 = vector.broadcast %20 : vector<1x4xf32> to vector<16x4xf32>
      %22 = arith.mulf %17, %21 : vector<16x4xf32>
      %23 = arith.addf %12, %22 : vector<16x4xf32>
      %c0_i32_24 = arith.constant 0 : i32
      %24 = arith.addi %arg7, %c0_i32_24 : i32
      %25 = arith.index_cast %24 : i32 to index
      %c1 = arith.constant 1 : index
      %c0_25 = arith.constant 0 : index
      %26 = vector.load %arg6[%25, %c1, %c0_25] : memref<22x22x4xf32, #tpu.memory_space<vmem>>, vector<1x16x4xf32>
      %27 = vector.shape_cast %26 : vector<1x16x4xf32> to vector<16x4xf32>
      %c1_26 = arith.constant 1 : index
      %c0_27 = arith.constant 0 : index
      %28 = vector.load %arg3[%c1_26, %c0_27] : memref<49x4xf32, #tpu.memory_space<vmem>>, vector<1x4xf32>
      %29 = vector.shape_cast %28 : vector<1x4xf32> to vector<4xf32>
      %30 = vector.shape_cast %29 : vector<4xf32> to vector<1x4xf32>
      %31 = vector.broadcast %30 : vector<1x4xf32> to vector<16x4xf32>
      %32 = arith.mulf %27, %31 : vector<16x4xf32>
      %33 = arith.addf %23, %32 : vector<16x4xf32>
      %c0_i32_28 = arith.constant 0 : i32
      %34 = arith.addi %arg7, %c0_i32_28 : i32
      %35 = arith.index_cast %34 : i32 to index
      %c2 = arith.constant 2 : index
      %c0_29 = arith.constant 0 : index
      %36 = vector.load %arg6[%35, %c2, %c0_29] : memref<22x22x4xf32, #tpu.memory_space<vmem>>, vector<1x16x4xf32>
      %37 = vector.shape_cast %36 : vector<1x16x4xf32> to vector<16x4xf32>
      %c2_30 = arith.constant 2 : index
      %c0_31 = arith.constant 0 : index
      %38 = vector.load %arg3[%c2_30, %c0_31] : memref<49x4xf32, #tpu.memory_space<vmem>>, vector<1x4xf32>
      %39 = vector.shape_cast %38 : vector<1x4xf32> to vector<4xf32>
      %40 = vector.shape_cast %39 : vector<4xf32> to vector<1x4xf32>
      %41 = vector.broadcast %40 : vector<1x4xf32> to vector<16x4xf32>
      %42 = arith.mulf %37, %41 : vector<16x4xf32>
      %43 = arith.addf %33, %42 : vector<16x4xf32>
      %c0_i32_32 = arith.constant 0 : i32
      %44 = arith.addi %arg7, %c0_i32_32 : i32
      %45 = arith.index_cast %44 : i32 to index
      %c3_33 = arith.constant 3 : index
      %c0_34 = arith.constant 0 : index
      %46 = vector.load %arg6[%45, %c3_33, %c0_34] : memref<22x22x4xf32, #tpu.memory_space<vmem>>, vector<1x16x4xf32>
      %47 = vector.shape_cast %46 : vector<1x16x4xf32> to vector<16x4xf32>
      %c3_35 = arith.constant 3 : index
      %c0_36 = arith.constant 0 : index
      %48 = vector.load %arg3[%c3_35, %c0_36] : memref<49x4xf32, #tpu.memory_space<vmem>>, vector<1x4xf32>
      %49 = vector.shape_cast %48 : vector<1x4xf32> to vector<4xf32>
      %50 = vector.shape_cast %49 : vector<4xf32> to vector<1x4xf32>
      %51 = vector.broadcast %50 : vector<1x4xf32> to vector<16x4xf32>
      %52 = arith.mulf %47, %51 : vector<16x4xf32>
      %53 = arith.addf %43, %52 : vector<16x4xf32>
      %c0_i32_37 = arith.constant 0 : i32
      %54 = arith.addi %arg7, %c0_i32_37 : i32
      %55 = arith.index_cast %54 : i32 to index
      %c4 = arith.constant 4 : index
      %c0_38 = arith.constant 0 : index
      %56 = vector.load %arg6[%55, %c4, %c0_38] : memref<22x22x4xf32, #tpu.memory_space<vmem>>, vector<1x16x4xf32>
      %57 = vector.shape_cast %56 : vector<1x16x4xf32> to vector<16x4xf32>
      %c4_39 = arith.constant 4 : index
      %c0_40 = arith.constant 0 : index
      %58 = vector.load %arg3[%c4_39, %c0_40] : memref<49x4xf32, #tpu.memory_space<vmem>>, vector<1x4xf32>
      %59 = vector.shape_cast %58 : vector<1x4xf32> to vector<4xf32>
      %60 = vector.shape_cast %59 : vector<4xf32> to vector<1x4xf32>
      %61 = vector.broadcast %60 : vector<1x4xf32> to vector<16x4xf32>
      %62 = arith.mulf %57, %61 : vector<16x4xf32>
      %63 = arith.addf %53, %62 : vector<16x4xf32>
      %c0_i32_41 = arith.constant 0 : i32
      %64 = arith.addi %arg7, %c0_i32_41 : i32
      %65 = arith.index_cast %64 : i32 to index
      %c5 = arith.constant 5 : index
      %c0_42 = arith.constant 0 : index
      %66 = vector.load %arg6[%65, %c5, %c0_42] : memref<22x22x4xf32, #tpu.memory_space<vmem>>, vector<1x16x4xf32>
      %67 = vector.shape_cast %66 : vector<1x16x4xf32> to vector<16x4xf32>
      %c5_43 = arith.constant 5 : index
      %c0_44 = arith.constant 0 : index
      %68 = vector.load %arg3[%c5_43, %c0_44] : memref<49x4xf32, #tpu.memory_space<vmem>>, vector<1x4xf32>
      %69 = vector.shape_cast %68 : vector<1x4xf32> to vector<4xf32>
      %70 = vector.shape_cast %69 : vector<4xf32> to vector<1x4xf32>
      %71 = vector.broadcast %70 : vector<1x4xf32> to vector<16x4xf32>
      %72 = arith.mulf %67, %71 : vector<16x4xf32>
      %73 = arith.addf %63, %72 : vector<16x4xf32>
      %c0_i32_45 = arith.constant 0 : i32
      %74 = arith.addi %arg7, %c0_i32_45 : i32
      %75 = arith.index_cast %74 : i32 to index
      %c6 = arith.constant 6 : index
      %c0_46 = arith.constant 0 : index
      %76 = vector.load %arg6[%75, %c6, %c0_46] : memref<22x22x4xf32, #tpu.memory_space<vmem>>, vector<1x16x4xf32>
      %77 = vector.shape_cast %76 : vector<1x16x4xf32> to vector<16x4xf32>
      %c6_47 = arith.constant 6 : index
      %c0_48 = arith.constant 0 : index
      %78 = vector.load %arg3[%c6_47, %c0_48] : memref<49x4xf32, #tpu.memory_space<vmem>>, vector<1x4xf32>
      %79 = vector.shape_cast %78 : vector<1x4xf32> to vector<4xf32>
      %80 = vector.shape_cast %79 : vector<4xf32> to vector<1x4xf32>
      %81 = vector.broadcast %80 : vector<1x4xf32> to vector<16x4xf32>
      %82 = arith.mulf %77, %81 : vector<16x4xf32>
      %83 = arith.addf %73, %82 : vector<16x4xf32>
      %c1_i32_49 = arith.constant 1 : i32
      %84 = arith.addi %arg7, %c1_i32_49 : i32
      %85 = arith.index_cast %84 : i32 to index
      %c0_50 = arith.constant 0 : index
      %c0_51 = arith.constant 0 : index
      %86 = vector.load %arg6[%85, %c0_50, %c0_51] : memref<22x22x4xf32, #tpu.memory_space<vmem>>, vector<1x16x4xf32>
      %87 = vector.shape_cast %86 : vector<1x16x4xf32> to vector<16x4xf32>
      %c7 = arith.constant 7 : index
      %c0_52 = arith.constant 0 : index
      %88 = vector.load %arg3[%c7, %c0_52] : memref<49x4xf32, #tpu.memory_space<vmem>>, vector<1x4xf32>
      %89 = vector.shape_cast %88 : vector<1x4xf32> to vector<4xf32>
      %90 = vector.shape_cast %89 : vector<4xf32> to vector<1x4xf32>
      %91 = vector.broadcast %90 : vector<1x4xf32> to vector<16x4xf32>
      %92 = arith.mulf %87, %91 : vector<16x4xf32>
      %93 = arith.addf %83, %92 : vector<16x4xf32>
      %c1_i32_53 = arith.constant 1 : i32
      %94 = arith.addi %arg7, %c1_i32_53 : i32
      %95 = arith.index_cast %94 : i32 to index
      %c1_54 = arith.constant 1 : index
      %c0_55 = arith.constant 0 : index
      %96 = vector.load %arg6[%95, %c1_54, %c0_55] : memref<22x22x4xf32, #tpu.memory_space<vmem>>, vector<1x16x4xf32>
      %97 = vector.shape_cast %96 : vector<1x16x4xf32> to vector<16x4xf32>
      %c8 = arith.constant 8 : index
      %c0_56 = arith.constant 0 : index
      %98 = vector.load %arg3[%c8, %c0_56] : memref<49x4xf32, #tpu.memory_space<vmem>>, vector<1x4xf32>
      %99 = vector.shape_cast %98 : vector<1x4xf32> to vector<4xf32>
      %100 = vector.shape_cast %99 : vector<4xf32> to vector<1x4xf32>
      %101 = vector.broadcast %100 : vector<1x4xf32> to vector<16x4xf32>
      %102 = arith.mulf %97, %101 : vector<16x4xf32>
      %103 = arith.addf %93, %102 : vector<16x4xf32>
      %c1_i32_57 = arith.constant 1 : i32
      %104 = arith.addi %arg7, %c1_i32_57 : i32
      %105 = arith.index_cast %104 : i32 to index
      %c2_58 = arith.constant 2 : index
      %c0_59 = arith.constant 0 : index
      %106 = vector.load %arg6[%105, %c2_58, %c0_59] : memref<22x22x4xf32, #tpu.memory_space<vmem>>, vector<1x16x4xf32>
      %107 = vector.shape_cast %106 : vector<1x16x4xf32> to vector<16x4xf32>
      %c9 = arith.constant 9 : index
      %c0_60 = arith.constant 0 : index
      %108 = vector.load %arg3[%c9, %c0_60] : memref<49x4xf32, #tpu.memory_space<vmem>>, vector<1x4xf32>
      %109 = vector.shape_cast %108 : vector<1x4xf32> to vector<4xf32>
      %110 = vector.shape_cast %109 : vector<4xf32> to vector<1x4xf32>
      %111 = vector.broadcast %110 : vector<1x4xf32> to vector<16x4xf32>
      %112 = arith.mulf %107, %111 : vector<16x4xf32>
      %113 = arith.addf %103, %112 : vector<16x4xf32>
      %c1_i32_61 = arith.constant 1 : i32
      %114 = arith.addi %arg7, %c1_i32_61 : i32
      %115 = arith.index_cast %114 : i32 to index
      %c3_62 = arith.constant 3 : index
      %c0_63 = arith.constant 0 : index
      %116 = vector.load %arg6[%115, %c3_62, %c0_63] : memref<22x22x4xf32, #tpu.memory_space<vmem>>, vector<1x16x4xf32>
      %117 = vector.shape_cast %116 : vector<1x16x4xf32> to vector<16x4xf32>
      %c10 = arith.constant 10 : index
      %c0_64 = arith.constant 0 : index
      %118 = vector.load %arg3[%c10, %c0_64] : memref<49x4xf32, #tpu.memory_space<vmem>>, vector<1x4xf32>
      %119 = vector.shape_cast %118 : vector<1x4xf32> to vector<4xf32>
      %120 = vector.shape_cast %119 : vector<4xf32> to vector<1x4xf32>
      %121 = vector.broadcast %120 : vector<1x4xf32> to vector<16x4xf32>
      %122 = arith.mulf %117, %121 : vector<16x4xf32>
      %123 = arith.addf %113, %122 : vector<16x4xf32>
      %c1_i32_65 = arith.constant 1 : i32
      %124 = arith.addi %arg7, %c1_i32_65 : i32
      %125 = arith.index_cast %124 : i32 to index
      %c4_66 = arith.constant 4 : index
      %c0_67 = arith.constant 0 : index
      %126 = vector.load %arg6[%125, %c4_66, %c0_67] : memref<22x22x4xf32, #tpu.memory_space<vmem>>, vector<1x16x4xf32>
      %127 = vector.shape_cast %126 : vector<1x16x4xf32> to vector<16x4xf32>
      %c11 = arith.constant 11 : index
      %c0_68 = arith.constant 0 : index
      %128 = vector.load %arg3[%c11, %c0_68] : memref<49x4xf32, #tpu.memory_space<vmem>>, vector<1x4xf32>
      %129 = vector.shape_cast %128 : vector<1x4xf32> to vector<4xf32>
      %130 = vector.shape_cast %129 : vector<4xf32> to vector<1x4xf32>
      %131 = vector.broadcast %130 : vector<1x4xf32> to vector<16x4xf32>
      %132 = arith.mulf %127, %131 : vector<16x4xf32>
      %133 = arith.addf %123, %132 : vector<16x4xf32>
      %c1_i32_69 = arith.constant 1 : i32
      %134 = arith.addi %arg7, %c1_i32_69 : i32
      %135 = arith.index_cast %134 : i32 to index
      %c5_70 = arith.constant 5 : index
      %c0_71 = arith.constant 0 : index
      %136 = vector.load %arg6[%135, %c5_70, %c0_71] : memref<22x22x4xf32, #tpu.memory_space<vmem>>, vector<1x16x4xf32>
      %137 = vector.shape_cast %136 : vector<1x16x4xf32> to vector<16x4xf32>
      %c12 = arith.constant 12 : index
      %c0_72 = arith.constant 0 : index
      %138 = vector.load %arg3[%c12, %c0_72] : memref<49x4xf32, #tpu.memory_space<vmem>>, vector<1x4xf32>
      %139 = vector.shape_cast %138 : vector<1x4xf32> to vector<4xf32>
      %140 = vector.shape_cast %139 : vector<4xf32> to vector<1x4xf32>
      %141 = vector.broadcast %140 : vector<1x4xf32> to vector<16x4xf32>
      %142 = arith.mulf %137, %141 : vector<16x4xf32>
      %143 = arith.addf %133, %142 : vector<16x4xf32>
      %c1_i32_73 = arith.constant 1 : i32
      %144 = arith.addi %arg7, %c1_i32_73 : i32
      %145 = arith.index_cast %144 : i32 to index
      %c6_74 = arith.constant 6 : index
      %c0_75 = arith.constant 0 : index
      %146 = vector.load %arg6[%145, %c6_74, %c0_75] : memref<22x22x4xf32, #tpu.memory_space<vmem>>, vector<1x16x4xf32>
      %147 = vector.shape_cast %146 : vector<1x16x4xf32> to vector<16x4xf32>
      %c13 = arith.constant 13 : index
      %c0_76 = arith.constant 0 : index
      %148 = vector.load %arg3[%c13, %c0_76] : memref<49x4xf32, #tpu.memory_space<vmem>>, vector<1x4xf32>
      %149 = vector.shape_cast %148 : vector<1x4xf32> to vector<4xf32>
      %150 = vector.shape_cast %149 : vector<4xf32> to vector<1x4xf32>
      %151 = vector.broadcast %150 : vector<1x4xf32> to vector<16x4xf32>
      %152 = arith.mulf %147, %151 : vector<16x4xf32>
      %153 = arith.addf %143, %152 : vector<16x4xf32>
      %c2_i32 = arith.constant 2 : i32
      %154 = arith.addi %arg7, %c2_i32 : i32
      %155 = arith.index_cast %154 : i32 to index
      %c0_77 = arith.constant 0 : index
      %c0_78 = arith.constant 0 : index
      %156 = vector.load %arg6[%155, %c0_77, %c0_78] : memref<22x22x4xf32, #tpu.memory_space<vmem>>, vector<1x16x4xf32>
      %157 = vector.shape_cast %156 : vector<1x16x4xf32> to vector<16x4xf32>
      %c14 = arith.constant 14 : index
      %c0_79 = arith.constant 0 : index
      %158 = vector.load %arg3[%c14, %c0_79] : memref<49x4xf32, #tpu.memory_space<vmem>>, vector<1x4xf32>
      %159 = vector.shape_cast %158 : vector<1x4xf32> to vector<4xf32>
      %160 = vector.shape_cast %159 : vector<4xf32> to vector<1x4xf32>
      %161 = vector.broadcast %160 : vector<1x4xf32> to vector<16x4xf32>
      %162 = arith.mulf %157, %161 : vector<16x4xf32>
      %163 = arith.addf %153, %162 : vector<16x4xf32>
      %c2_i32_80 = arith.constant 2 : i32
      %164 = arith.addi %arg7, %c2_i32_80 : i32
      %165 = arith.index_cast %164 : i32 to index
      %c1_81 = arith.constant 1 : index
      %c0_82 = arith.constant 0 : index
      %166 = vector.load %arg6[%165, %c1_81, %c0_82] : memref<22x22x4xf32, #tpu.memory_space<vmem>>, vector<1x16x4xf32>
      %167 = vector.shape_cast %166 : vector<1x16x4xf32> to vector<16x4xf32>
      %c15 = arith.constant 15 : index
      %c0_83 = arith.constant 0 : index
      %168 = vector.load %arg3[%c15, %c0_83] : memref<49x4xf32, #tpu.memory_space<vmem>>, vector<1x4xf32>
      %169 = vector.shape_cast %168 : vector<1x4xf32> to vector<4xf32>
      %170 = vector.shape_cast %169 : vector<4xf32> to vector<1x4xf32>
      %171 = vector.broadcast %170 : vector<1x4xf32> to vector<16x4xf32>
      %172 = arith.mulf %167, %171 : vector<16x4xf32>
      %173 = arith.addf %163, %172 : vector<16x4xf32>
      %c2_i32_84 = arith.constant 2 : i32
      %174 = arith.addi %arg7, %c2_i32_84 : i32
      %175 = arith.index_cast %174 : i32 to index
      %c2_85 = arith.constant 2 : index
      %c0_86 = arith.constant 0 : index
      %176 = vector.load %arg6[%175, %c2_85, %c0_86] : memref<22x22x4xf32, #tpu.memory_space<vmem>>, vector<1x16x4xf32>
      %177 = vector.shape_cast %176 : vector<1x16x4xf32> to vector<16x4xf32>
      %c16 = arith.constant 16 : index
      %c0_87 = arith.constant 0 : index
      %178 = vector.load %arg3[%c16, %c0_87] : memref<49x4xf32, #tpu.memory_space<vmem>>, vector<1x4xf32>
      %179 = vector.shape_cast %178 : vector<1x4xf32> to vector<4xf32>
      %180 = vector.shape_cast %179 : vector<4xf32> to vector<1x4xf32>
      %181 = vector.broadcast %180 : vector<1x4xf32> to vector<16x4xf32>
      %182 = arith.mulf %177, %181 : vector<16x4xf32>
      %183 = arith.addf %173, %182 : vector<16x4xf32>
      %c2_i32_88 = arith.constant 2 : i32
      %184 = arith.addi %arg7, %c2_i32_88 : i32
      %185 = arith.index_cast %184 : i32 to index
      %c3_89 = arith.constant 3 : index
      %c0_90 = arith.constant 0 : index
      %186 = vector.load %arg6[%185, %c3_89, %c0_90] : memref<22x22x4xf32, #tpu.memory_space<vmem>>, vector<1x16x4xf32>
      %187 = vector.shape_cast %186 : vector<1x16x4xf32> to vector<16x4xf32>
      %c17 = arith.constant 17 : index
      %c0_91 = arith.constant 0 : index
      %188 = vector.load %arg3[%c17, %c0_91] : memref<49x4xf32, #tpu.memory_space<vmem>>, vector<1x4xf32>
      %189 = vector.shape_cast %188 : vector<1x4xf32> to vector<4xf32>
      %190 = vector.shape_cast %189 : vector<4xf32> to vector<1x4xf32>
      %191 = vector.broadcast %190 : vector<1x4xf32> to vector<16x4xf32>
      %192 = arith.mulf %187, %191 : vector<16x4xf32>
      %193 = arith.addf %183, %192 : vector<16x4xf32>
      %c2_i32_92 = arith.constant 2 : i32
      %194 = arith.addi %arg7, %c2_i32_92 : i32
      %195 = arith.index_cast %194 : i32 to index
      %c4_93 = arith.constant 4 : index
      %c0_94 = arith.constant 0 : index
      %196 = vector.load %arg6[%195, %c4_93, %c0_94] : memref<22x22x4xf32, #tpu.memory_space<vmem>>, vector<1x16x4xf32>
      %197 = vector.shape_cast %196 : vector<1x16x4xf32> to vector<16x4xf32>
      %c18 = arith.constant 18 : index
      %c0_95 = arith.constant 0 : index
      %198 = vector.load %arg3[%c18, %c0_95] : memref<49x4xf32, #tpu.memory_space<vmem>>, vector<1x4xf32>
      %199 = vector.shape_cast %198 : vector<1x4xf32> to vector<4xf32>
      %200 = vector.shape_cast %199 : vector<4xf32> to vector<1x4xf32>
      %201 = vector.broadcast %200 : vector<1x4xf32> to vector<16x4xf32>
      %202 = arith.mulf %197, %201 : vector<16x4xf32>
      %203 = arith.addf %193, %202 : vector<16x4xf32>
      %c2_i32_96 = arith.constant 2 : i32
      %204 = arith.addi %arg7, %c2_i32_96 : i32
      %205 = arith.index_cast %204 : i32 to index
      %c5_97 = arith.constant 5 : index
      %c0_98 = arith.constant 0 : index
      %206 = vector.load %arg6[%205, %c5_97, %c0_98] : memref<22x22x4xf32, #tpu.memory_space<vmem>>, vector<1x16x4xf32>
      %207 = vector.shape_cast %206 : vector<1x16x4xf32> to vector<16x4xf32>
      %c19_99 = arith.constant 19 : index
      %c0_100 = arith.constant 0 : index
      %208 = vector.load %arg3[%c19_99, %c0_100] : memref<49x4xf32, #tpu.memory_space<vmem>>, vector<1x4xf32>
      %209 = vector.shape_cast %208 : vector<1x4xf32> to vector<4xf32>
      %210 = vector.shape_cast %209 : vector<4xf32> to vector<1x4xf32>
      %211 = vector.broadcast %210 : vector<1x4xf32> to vector<16x4xf32>
      %212 = arith.mulf %207, %211 : vector<16x4xf32>
      %213 = arith.addf %203, %212 : vector<16x4xf32>
      %c2_i32_101 = arith.constant 2 : i32
      %214 = arith.addi %arg7, %c2_i32_101 : i32
      %215 = arith.index_cast %214 : i32 to index
      %c6_102 = arith.constant 6 : index
      %c0_103 = arith.constant 0 : index
      %216 = vector.load %arg6[%215, %c6_102, %c0_103] : memref<22x22x4xf32, #tpu.memory_space<vmem>>, vector<1x16x4xf32>
      %217 = vector.shape_cast %216 : vector<1x16x4xf32> to vector<16x4xf32>
      %c20 = arith.constant 20 : index
      %c0_104 = arith.constant 0 : index
      %218 = vector.load %arg3[%c20, %c0_104] : memref<49x4xf32, #tpu.memory_space<vmem>>, vector<1x4xf32>
      %219 = vector.shape_cast %218 : vector<1x4xf32> to vector<4xf32>
      %220 = vector.shape_cast %219 : vector<4xf32> to vector<1x4xf32>
      %221 = vector.broadcast %220 : vector<1x4xf32> to vector<16x4xf32>
      %222 = arith.mulf %217, %221 : vector<16x4xf32>
      %223 = arith.addf %213, %222 : vector<16x4xf32>
      %c3_i32 = arith.constant 3 : i32
      %224 = arith.addi %arg7, %c3_i32 : i32
      %225 = arith.index_cast %224 : i32 to index
      %c0_105 = arith.constant 0 : index
      %c0_106 = arith.constant 0 : index
      %226 = vector.load %arg6[%225, %c0_105, %c0_106] : memref<22x22x4xf32, #tpu.memory_space<vmem>>, vector<1x16x4xf32>
      %227 = vector.shape_cast %226 : vector<1x16x4xf32> to vector<16x4xf32>
      %c21 = arith.constant 21 : index
      %c0_107 = arith.constant 0 : index
      %228 = vector.load %arg3[%c21, %c0_107] : memref<49x4xf32, #tpu.memory_space<vmem>>, vector<1x4xf32>
      %229 = vector.shape_cast %228 : vector<1x4xf32> to vector<4xf32>
      %230 = vector.shape_cast %229 : vector<4xf32> to vector<1x4xf32>
      %231 = vector.broadcast %230 : vector<1x4xf32> to vector<16x4xf32>
      %232 = arith.mulf %227, %231 : vector<16x4xf32>
      %233 = arith.addf %223, %232 : vector<16x4xf32>
      %c3_i32_108 = arith.constant 3 : i32
      %234 = arith.addi %arg7, %c3_i32_108 : i32
      %235 = arith.index_cast %234 : i32 to index
      %c1_109 = arith.constant 1 : index
      %c0_110 = arith.constant 0 : index
      %236 = vector.load %arg6[%235, %c1_109, %c0_110] : memref<22x22x4xf32, #tpu.memory_space<vmem>>, vector<1x16x4xf32>
      %237 = vector.shape_cast %236 : vector<1x16x4xf32> to vector<16x4xf32>
      %c22 = arith.constant 22 : index
      %c0_111 = arith.constant 0 : index
      %238 = vector.load %arg3[%c22, %c0_111] : memref<49x4xf32, #tpu.memory_space<vmem>>, vector<1x4xf32>
      %239 = vector.shape_cast %238 : vector<1x4xf32> to vector<4xf32>
      %240 = vector.shape_cast %239 : vector<4xf32> to vector<1x4xf32>
      %241 = vector.broadcast %240 : vector<1x4xf32> to vector<16x4xf32>
      %242 = arith.mulf %237, %241 : vector<16x4xf32>
      %243 = arith.addf %233, %242 : vector<16x4xf32>
      %c3_i32_112 = arith.constant 3 : i32
      %244 = arith.addi %arg7, %c3_i32_112 : i32
      %245 = arith.index_cast %244 : i32 to index
      %c2_113 = arith.constant 2 : index
      %c0_114 = arith.constant 0 : index
      %246 = vector.load %arg6[%245, %c2_113, %c0_114] : memref<22x22x4xf32, #tpu.memory_space<vmem>>, vector<1x16x4xf32>
      %247 = vector.shape_cast %246 : vector<1x16x4xf32> to vector<16x4xf32>
      %c23 = arith.constant 23 : index
      %c0_115 = arith.constant 0 : index
      %248 = vector.load %arg3[%c23, %c0_115] : memref<49x4xf32, #tpu.memory_space<vmem>>, vector<1x4xf32>
      %249 = vector.shape_cast %248 : vector<1x4xf32> to vector<4xf32>
      %250 = vector.shape_cast %249 : vector<4xf32> to vector<1x4xf32>
      %251 = vector.broadcast %250 : vector<1x4xf32> to vector<16x4xf32>
      %252 = arith.mulf %247, %251 : vector<16x4xf32>
      %253 = arith.addf %243, %252 : vector<16x4xf32>
      %c3_i32_116 = arith.constant 3 : i32
      %254 = arith.addi %arg7, %c3_i32_116 : i32
      %255 = arith.index_cast %254 : i32 to index
      %c3_117 = arith.constant 3 : index
      %c0_118 = arith.constant 0 : index
      %256 = vector.load %arg6[%255, %c3_117, %c0_118] : memref<22x22x4xf32, #tpu.memory_space<vmem>>, vector<1x16x4xf32>
      %257 = vector.shape_cast %256 : vector<1x16x4xf32> to vector<16x4xf32>
      %c24 = arith.constant 24 : index
      %c0_119 = arith.constant 0 : index
      %258 = vector.load %arg3[%c24, %c0_119] : memref<49x4xf32, #tpu.memory_space<vmem>>, vector<1x4xf32>
      %259 = vector.shape_cast %258 : vector<1x4xf32> to vector<4xf32>
      %260 = vector.shape_cast %259 : vector<4xf32> to vector<1x4xf32>
      %261 = vector.broadcast %260 : vector<1x4xf32> to vector<16x4xf32>
      %262 = arith.mulf %257, %261 : vector<16x4xf32>
      %263 = arith.addf %253, %262 : vector<16x4xf32>
      %c3_i32_120 = arith.constant 3 : i32
      %264 = arith.addi %arg7, %c3_i32_120 : i32
      %265 = arith.index_cast %264 : i32 to index
      %c4_121 = arith.constant 4 : index
      %c0_122 = arith.constant 0 : index
      %266 = vector.load %arg6[%265, %c4_121, %c0_122] : memref<22x22x4xf32, #tpu.memory_space<vmem>>, vector<1x16x4xf32>
      %267 = vector.shape_cast %266 : vector<1x16x4xf32> to vector<16x4xf32>
      %c25 = arith.constant 25 : index
      %c0_123 = arith.constant 0 : index
      %268 = vector.load %arg3[%c25, %c0_123] : memref<49x4xf32, #tpu.memory_space<vmem>>, vector<1x4xf32>
      %269 = vector.shape_cast %268 : vector<1x4xf32> to vector<4xf32>
      %270 = vector.shape_cast %269 : vector<4xf32> to vector<1x4xf32>
      %271 = vector.broadcast %270 : vector<1x4xf32> to vector<16x4xf32>
      %272 = arith.mulf %267, %271 : vector<16x4xf32>
      %273 = arith.addf %263, %272 : vector<16x4xf32>
      %c3_i32_124 = arith.constant 3 : i32
      %274 = arith.addi %arg7, %c3_i32_124 : i32
      %275 = arith.index_cast %274 : i32 to index
      %c5_125 = arith.constant 5 : index
      %c0_126 = arith.constant 0 : index
      %276 = vector.load %arg6[%275, %c5_125, %c0_126] : memref<22x22x4xf32, #tpu.memory_space<vmem>>, vector<1x16x4xf32>
      %277 = vector.shape_cast %276 : vector<1x16x4xf32> to vector<16x4xf32>
      %c26 = arith.constant 26 : index
      %c0_127 = arith.constant 0 : index
      %278 = vector.load %arg3[%c26, %c0_127] : memref<49x4xf32, #tpu.memory_space<vmem>>, vector<1x4xf32>
      %279 = vector.shape_cast %278 : vector<1x4xf32> to vector<4xf32>
      %280 = vector.shape_cast %279 : vector<4xf32> to vector<1x4xf32>
      %281 = vector.broadcast %280 : vector<1x4xf32> to vector<16x4xf32>
      %282 = arith.mulf %277, %281 : vector<16x4xf32>
      %283 = arith.addf %273, %282 : vector<16x4xf32>
      %c3_i32_128 = arith.constant 3 : i32
      %284 = arith.addi %arg7, %c3_i32_128 : i32
      %285 = arith.index_cast %284 : i32 to index
      %c6_129 = arith.constant 6 : index
      %c0_130 = arith.constant 0 : index
      %286 = vector.load %arg6[%285, %c6_129, %c0_130] : memref<22x22x4xf32, #tpu.memory_space<vmem>>, vector<1x16x4xf32>
      %287 = vector.shape_cast %286 : vector<1x16x4xf32> to vector<16x4xf32>
      %c27 = arith.constant 27 : index
      %c0_131 = arith.constant 0 : index
      %288 = vector.load %arg3[%c27, %c0_131] : memref<49x4xf32, #tpu.memory_space<vmem>>, vector<1x4xf32>
      %289 = vector.shape_cast %288 : vector<1x4xf32> to vector<4xf32>
      %290 = vector.shape_cast %289 : vector<4xf32> to vector<1x4xf32>
      %291 = vector.broadcast %290 : vector<1x4xf32> to vector<16x4xf32>
      %292 = arith.mulf %287, %291 : vector<16x4xf32>
      %293 = arith.addf %283, %292 : vector<16x4xf32>
      %c4_i32 = arith.constant 4 : i32
      %294 = arith.addi %arg7, %c4_i32 : i32
      %295 = arith.index_cast %294 : i32 to index
      %c0_132 = arith.constant 0 : index
      %c0_133 = arith.constant 0 : index
      %296 = vector.load %arg6[%295, %c0_132, %c0_133] : memref<22x22x4xf32, #tpu.memory_space<vmem>>, vector<1x16x4xf32>
      %297 = vector.shape_cast %296 : vector<1x16x4xf32> to vector<16x4xf32>
      %c28 = arith.constant 28 : index
      %c0_134 = arith.constant 0 : index
      %298 = vector.load %arg3[%c28, %c0_134] : memref<49x4xf32, #tpu.memory_space<vmem>>, vector<1x4xf32>
      %299 = vector.shape_cast %298 : vector<1x4xf32> to vector<4xf32>
      %300 = vector.shape_cast %299 : vector<4xf32> to vector<1x4xf32>
      %301 = vector.broadcast %300 : vector<1x4xf32> to vector<16x4xf32>
      %302 = arith.mulf %297, %301 : vector<16x4xf32>
      %303 = arith.addf %293, %302 : vector<16x4xf32>
      %c4_i32_135 = arith.constant 4 : i32
      %304 = arith.addi %arg7, %c4_i32_135 : i32
      %305 = arith.index_cast %304 : i32 to index
      %c1_136 = arith.constant 1 : index
      %c0_137 = arith.constant 0 : index
      %306 = vector.load %arg6[%305, %c1_136, %c0_137] : memref<22x22x4xf32, #tpu.memory_space<vmem>>, vector<1x16x4xf32>
      %307 = vector.shape_cast %306 : vector<1x16x4xf32> to vector<16x4xf32>
      %c29 = arith.constant 29 : index
      %c0_138 = arith.constant 0 : index
      %308 = vector.load %arg3[%c29, %c0_138] : memref<49x4xf32, #tpu.memory_space<vmem>>, vector<1x4xf32>
      %309 = vector.shape_cast %308 : vector<1x4xf32> to vector<4xf32>
      %310 = vector.shape_cast %309 : vector<4xf32> to vector<1x4xf32>
      %311 = vector.broadcast %310 : vector<1x4xf32> to vector<16x4xf32>
      %312 = arith.mulf %307, %311 : vector<16x4xf32>
      %313 = arith.addf %303, %312 : vector<16x4xf32>
      %c4_i32_139 = arith.constant 4 : i32
      %314 = arith.addi %arg7, %c4_i32_139 : i32
      %315 = arith.index_cast %314 : i32 to index
      %c2_140 = arith.constant 2 : index
      %c0_141 = arith.constant 0 : index
      %316 = vector.load %arg6[%315, %c2_140, %c0_141] : memref<22x22x4xf32, #tpu.memory_space<vmem>>, vector<1x16x4xf32>
      %317 = vector.shape_cast %316 : vector<1x16x4xf32> to vector<16x4xf32>
      %c30 = arith.constant 30 : index
      %c0_142 = arith.constant 0 : index
      %318 = vector.load %arg3[%c30, %c0_142] : memref<49x4xf32, #tpu.memory_space<vmem>>, vector<1x4xf32>
      %319 = vector.shape_cast %318 : vector<1x4xf32> to vector<4xf32>
      %320 = vector.shape_cast %319 : vector<4xf32> to vector<1x4xf32>
      %321 = vector.broadcast %320 : vector<1x4xf32> to vector<16x4xf32>
      %322 = arith.mulf %317, %321 : vector<16x4xf32>
      %323 = arith.addf %313, %322 : vector<16x4xf32>
      %c4_i32_143 = arith.constant 4 : i32
      %324 = arith.addi %arg7, %c4_i32_143 : i32
      %325 = arith.index_cast %324 : i32 to index
      %c3_144 = arith.constant 3 : index
      %c0_145 = arith.constant 0 : index
      %326 = vector.load %arg6[%325, %c3_144, %c0_145] : memref<22x22x4xf32, #tpu.memory_space<vmem>>, vector<1x16x4xf32>
      %327 = vector.shape_cast %326 : vector<1x16x4xf32> to vector<16x4xf32>
      %c31 = arith.constant 31 : index
      %c0_146 = arith.constant 0 : index
      %328 = vector.load %arg3[%c31, %c0_146] : memref<49x4xf32, #tpu.memory_space<vmem>>, vector<1x4xf32>
      %329 = vector.shape_cast %328 : vector<1x4xf32> to vector<4xf32>
      %330 = vector.shape_cast %329 : vector<4xf32> to vector<1x4xf32>
      %331 = vector.broadcast %330 : vector<1x4xf32> to vector<16x4xf32>
      %332 = arith.mulf %327, %331 : vector<16x4xf32>
      %333 = arith.addf %323, %332 : vector<16x4xf32>
      %c4_i32_147 = arith.constant 4 : i32
      %334 = arith.addi %arg7, %c4_i32_147 : i32
      %335 = arith.index_cast %334 : i32 to index
      %c4_148 = arith.constant 4 : index
      %c0_149 = arith.constant 0 : index
      %336 = vector.load %arg6[%335, %c4_148, %c0_149] : memref<22x22x4xf32, #tpu.memory_space<vmem>>, vector<1x16x4xf32>
      %337 = vector.shape_cast %336 : vector<1x16x4xf32> to vector<16x4xf32>
      %c32 = arith.constant 32 : index
      %c0_150 = arith.constant 0 : index
      %338 = vector.load %arg3[%c32, %c0_150] : memref<49x4xf32, #tpu.memory_space<vmem>>, vector<1x4xf32>
      %339 = vector.shape_cast %338 : vector<1x4xf32> to vector<4xf32>
      %340 = vector.shape_cast %339 : vector<4xf32> to vector<1x4xf32>
      %341 = vector.broadcast %340 : vector<1x4xf32> to vector<16x4xf32>
      %342 = arith.mulf %337, %341 : vector<16x4xf32>
      %343 = arith.addf %333, %342 : vector<16x4xf32>
      %c4_i32_151 = arith.constant 4 : i32
      %344 = arith.addi %arg7, %c4_i32_151 : i32
      %345 = arith.index_cast %344 : i32 to index
      %c5_152 = arith.constant 5 : index
      %c0_153 = arith.constant 0 : index
      %346 = vector.load %arg6[%345, %c5_152, %c0_153] : memref<22x22x4xf32, #tpu.memory_space<vmem>>, vector<1x16x4xf32>
      %347 = vector.shape_cast %346 : vector<1x16x4xf32> to vector<16x4xf32>
      %c33 = arith.constant 33 : index
      %c0_154 = arith.constant 0 : index
      %348 = vector.load %arg3[%c33, %c0_154] : memref<49x4xf32, #tpu.memory_space<vmem>>, vector<1x4xf32>
      %349 = vector.shape_cast %348 : vector<1x4xf32> to vector<4xf32>
      %350 = vector.shape_cast %349 : vector<4xf32> to vector<1x4xf32>
      %351 = vector.broadcast %350 : vector<1x4xf32> to vector<16x4xf32>
      %352 = arith.mulf %347, %351 : vector<16x4xf32>
      %353 = arith.addf %343, %352 : vector<16x4xf32>
      %c4_i32_155 = arith.constant 4 : i32
      %354 = arith.addi %arg7, %c4_i32_155 : i32
      %355 = arith.index_cast %354 : i32 to index
      %c6_156 = arith.constant 6 : index
      %c0_157 = arith.constant 0 : index
      %356 = vector.load %arg6[%355, %c6_156, %c0_157] : memref<22x22x4xf32, #tpu.memory_space<vmem>>, vector<1x16x4xf32>
      %357 = vector.shape_cast %356 : vector<1x16x4xf32> to vector<16x4xf32>
      %c34 = arith.constant 34 : index
      %c0_158 = arith.constant 0 : index
      %358 = vector.load %arg3[%c34, %c0_158] : memref<49x4xf32, #tpu.memory_space<vmem>>, vector<1x4xf32>
      %359 = vector.shape_cast %358 : vector<1x4xf32> to vector<4xf32>
      %360 = vector.shape_cast %359 : vector<4xf32> to vector<1x4xf32>
      %361 = vector.broadcast %360 : vector<1x4xf32> to vector<16x4xf32>
      %362 = arith.mulf %357, %361 : vector<16x4xf32>
      %363 = arith.addf %353, %362 : vector<16x4xf32>
      %c5_i32 = arith.constant 5 : i32
      %364 = arith.addi %arg7, %c5_i32 : i32
      %365 = arith.index_cast %364 : i32 to index
      %c0_159 = arith.constant 0 : index
      %c0_160 = arith.constant 0 : index
      %366 = vector.load %arg6[%365, %c0_159, %c0_160] : memref<22x22x4xf32, #tpu.memory_space<vmem>>, vector<1x16x4xf32>
      %367 = vector.shape_cast %366 : vector<1x16x4xf32> to vector<16x4xf32>
      %c35 = arith.constant 35 : index
      %c0_161 = arith.constant 0 : index
      %368 = vector.load %arg3[%c35, %c0_161] : memref<49x4xf32, #tpu.memory_space<vmem>>, vector<1x4xf32>
      %369 = vector.shape_cast %368 : vector<1x4xf32> to vector<4xf32>
      %370 = vector.shape_cast %369 : vector<4xf32> to vector<1x4xf32>
      %371 = vector.broadcast %370 : vector<1x4xf32> to vector<16x4xf32>
      %372 = arith.mulf %367, %371 : vector<16x4xf32>
      %373 = arith.addf %363, %372 : vector<16x4xf32>
      %c5_i32_162 = arith.constant 5 : i32
      %374 = arith.addi %arg7, %c5_i32_162 : i32
      %375 = arith.index_cast %374 : i32 to index
      %c1_163 = arith.constant 1 : index
      %c0_164 = arith.constant 0 : index
      %376 = vector.load %arg6[%375, %c1_163, %c0_164] : memref<22x22x4xf32, #tpu.memory_space<vmem>>, vector<1x16x4xf32>
      %377 = vector.shape_cast %376 : vector<1x16x4xf32> to vector<16x4xf32>
      %c36 = arith.constant 36 : index
      %c0_165 = arith.constant 0 : index
      %378 = vector.load %arg3[%c36, %c0_165] : memref<49x4xf32, #tpu.memory_space<vmem>>, vector<1x4xf32>
      %379 = vector.shape_cast %378 : vector<1x4xf32> to vector<4xf32>
      %380 = vector.shape_cast %379 : vector<4xf32> to vector<1x4xf32>
      %381 = vector.broadcast %380 : vector<1x4xf32> to vector<16x4xf32>
      %382 = arith.mulf %377, %381 : vector<16x4xf32>
      %383 = arith.addf %373, %382 : vector<16x4xf32>
      %c5_i32_166 = arith.constant 5 : i32
      %384 = arith.addi %arg7, %c5_i32_166 : i32
      %385 = arith.index_cast %384 : i32 to index
      %c2_167 = arith.constant 2 : index
      %c0_168 = arith.constant 0 : index
      %386 = vector.load %arg6[%385, %c2_167, %c0_168] : memref<22x22x4xf32, #tpu.memory_space<vmem>>, vector<1x16x4xf32>
      %387 = vector.shape_cast %386 : vector<1x16x4xf32> to vector<16x4xf32>
      %c37 = arith.constant 37 : index
      %c0_169 = arith.constant 0 : index
      %388 = vector.load %arg3[%c37, %c0_169] : memref<49x4xf32, #tpu.memory_space<vmem>>, vector<1x4xf32>
      %389 = vector.shape_cast %388 : vector<1x4xf32> to vector<4xf32>
      %390 = vector.shape_cast %389 : vector<4xf32> to vector<1x4xf32>
      %391 = vector.broadcast %390 : vector<1x4xf32> to vector<16x4xf32>
      %392 = arith.mulf %387, %391 : vector<16x4xf32>
      %393 = arith.addf %383, %392 : vector<16x4xf32>
      %c5_i32_170 = arith.constant 5 : i32
      %394 = arith.addi %arg7, %c5_i32_170 : i32
      %395 = arith.index_cast %394 : i32 to index
      %c3_171 = arith.constant 3 : index
      %c0_172 = arith.constant 0 : index
      %396 = vector.load %arg6[%395, %c3_171, %c0_172] : memref<22x22x4xf32, #tpu.memory_space<vmem>>, vector<1x16x4xf32>
      %397 = vector.shape_cast %396 : vector<1x16x4xf32> to vector<16x4xf32>
      %c38 = arith.constant 38 : index
      %c0_173 = arith.constant 0 : index
      %398 = vector.load %arg3[%c38, %c0_173] : memref<49x4xf32, #tpu.memory_space<vmem>>, vector<1x4xf32>
      %399 = vector.shape_cast %398 : vector<1x4xf32> to vector<4xf32>
      %400 = vector.shape_cast %399 : vector<4xf32> to vector<1x4xf32>
      %401 = vector.broadcast %400 : vector<1x4xf32> to vector<16x4xf32>
      %402 = arith.mulf %397, %401 : vector<16x4xf32>
      %403 = arith.addf %393, %402 : vector<16x4xf32>
      %c5_i32_174 = arith.constant 5 : i32
      %404 = arith.addi %arg7, %c5_i32_174 : i32
      %405 = arith.index_cast %404 : i32 to index
      %c4_175 = arith.constant 4 : index
      %c0_176 = arith.constant 0 : index
      %406 = vector.load %arg6[%405, %c4_175, %c0_176] : memref<22x22x4xf32, #tpu.memory_space<vmem>>, vector<1x16x4xf32>
      %407 = vector.shape_cast %406 : vector<1x16x4xf32> to vector<16x4xf32>
      %c39 = arith.constant 39 : index
      %c0_177 = arith.constant 0 : index
      %408 = vector.load %arg3[%c39, %c0_177] : memref<49x4xf32, #tpu.memory_space<vmem>>, vector<1x4xf32>
      %409 = vector.shape_cast %408 : vector<1x4xf32> to vector<4xf32>
      %410 = vector.shape_cast %409 : vector<4xf32> to vector<1x4xf32>
      %411 = vector.broadcast %410 : vector<1x4xf32> to vector<16x4xf32>
      %412 = arith.mulf %407, %411 : vector<16x4xf32>
      %413 = arith.addf %403, %412 : vector<16x4xf32>
      %c5_i32_178 = arith.constant 5 : i32
      %414 = arith.addi %arg7, %c5_i32_178 : i32
      %415 = arith.index_cast %414 : i32 to index
      %c5_179 = arith.constant 5 : index
      %c0_180 = arith.constant 0 : index
      %416 = vector.load %arg6[%415, %c5_179, %c0_180] : memref<22x22x4xf32, #tpu.memory_space<vmem>>, vector<1x16x4xf32>
      %417 = vector.shape_cast %416 : vector<1x16x4xf32> to vector<16x4xf32>
      %c40 = arith.constant 40 : index
      %c0_181 = arith.constant 0 : index
      %418 = vector.load %arg3[%c40, %c0_181] : memref<49x4xf32, #tpu.memory_space<vmem>>, vector<1x4xf32>
      %419 = vector.shape_cast %418 : vector<1x4xf32> to vector<4xf32>
      %420 = vector.shape_cast %419 : vector<4xf32> to vector<1x4xf32>
      %421 = vector.broadcast %420 : vector<1x4xf32> to vector<16x4xf32>
      %422 = arith.mulf %417, %421 : vector<16x4xf32>
      %423 = arith.addf %413, %422 : vector<16x4xf32>
      %c5_i32_182 = arith.constant 5 : i32
      %424 = arith.addi %arg7, %c5_i32_182 : i32
      %425 = arith.index_cast %424 : i32 to index
      %c6_183 = arith.constant 6 : index
      %c0_184 = arith.constant 0 : index
      %426 = vector.load %arg6[%425, %c6_183, %c0_184] : memref<22x22x4xf32, #tpu.memory_space<vmem>>, vector<1x16x4xf32>
      %427 = vector.shape_cast %426 : vector<1x16x4xf32> to vector<16x4xf32>
      %c41 = arith.constant 41 : index
      %c0_185 = arith.constant 0 : index
      %428 = vector.load %arg3[%c41, %c0_185] : memref<49x4xf32, #tpu.memory_space<vmem>>, vector<1x4xf32>
      %429 = vector.shape_cast %428 : vector<1x4xf32> to vector<4xf32>
      %430 = vector.shape_cast %429 : vector<4xf32> to vector<1x4xf32>
      %431 = vector.broadcast %430 : vector<1x4xf32> to vector<16x4xf32>
      %432 = arith.mulf %427, %431 : vector<16x4xf32>
      %433 = arith.addf %423, %432 : vector<16x4xf32>
      %c6_i32 = arith.constant 6 : i32
      %434 = arith.addi %arg7, %c6_i32 : i32
      %435 = arith.index_cast %434 : i32 to index
      %c0_186 = arith.constant 0 : index
      %c0_187 = arith.constant 0 : index
      %436 = vector.load %arg6[%435, %c0_186, %c0_187] : memref<22x22x4xf32, #tpu.memory_space<vmem>>, vector<1x16x4xf32>
      %437 = vector.shape_cast %436 : vector<1x16x4xf32> to vector<16x4xf32>
      %c42 = arith.constant 42 : index
      %c0_188 = arith.constant 0 : index
      %438 = vector.load %arg3[%c42, %c0_188] : memref<49x4xf32, #tpu.memory_space<vmem>>, vector<1x4xf32>
      %439 = vector.shape_cast %438 : vector<1x4xf32> to vector<4xf32>
      %440 = vector.shape_cast %439 : vector<4xf32> to vector<1x4xf32>
      %441 = vector.broadcast %440 : vector<1x4xf32> to vector<16x4xf32>
      %442 = arith.mulf %437, %441 : vector<16x4xf32>
      %443 = arith.addf %433, %442 : vector<16x4xf32>
      %c6_i32_189 = arith.constant 6 : i32
      %444 = arith.addi %arg7, %c6_i32_189 : i32
      %445 = arith.index_cast %444 : i32 to index
      %c1_190 = arith.constant 1 : index
      %c0_191 = arith.constant 0 : index
      %446 = vector.load %arg6[%445, %c1_190, %c0_191] : memref<22x22x4xf32, #tpu.memory_space<vmem>>, vector<1x16x4xf32>
      %447 = vector.shape_cast %446 : vector<1x16x4xf32> to vector<16x4xf32>
      %c43 = arith.constant 43 : index
      %c0_192 = arith.constant 0 : index
      %448 = vector.load %arg3[%c43, %c0_192] : memref<49x4xf32, #tpu.memory_space<vmem>>, vector<1x4xf32>
      %449 = vector.shape_cast %448 : vector<1x4xf32> to vector<4xf32>
      %450 = vector.shape_cast %449 : vector<4xf32> to vector<1x4xf32>
      %451 = vector.broadcast %450 : vector<1x4xf32> to vector<16x4xf32>
      %452 = arith.mulf %447, %451 : vector<16x4xf32>
      %453 = arith.addf %443, %452 : vector<16x4xf32>
      %c6_i32_193 = arith.constant 6 : i32
      %454 = arith.addi %arg7, %c6_i32_193 : i32
      %455 = arith.index_cast %454 : i32 to index
      %c2_194 = arith.constant 2 : index
      %c0_195 = arith.constant 0 : index
      %456 = vector.load %arg6[%455, %c2_194, %c0_195] : memref<22x22x4xf32, #tpu.memory_space<vmem>>, vector<1x16x4xf32>
      %457 = vector.shape_cast %456 : vector<1x16x4xf32> to vector<16x4xf32>
      %c44 = arith.constant 44 : index
      %c0_196 = arith.constant 0 : index
      %458 = vector.load %arg3[%c44, %c0_196] : memref<49x4xf32, #tpu.memory_space<vmem>>, vector<1x4xf32>
      %459 = vector.shape_cast %458 : vector<1x4xf32> to vector<4xf32>
      %460 = vector.shape_cast %459 : vector<4xf32> to vector<1x4xf32>
      %461 = vector.broadcast %460 : vector<1x4xf32> to vector<16x4xf32>
      %462 = arith.mulf %457, %461 : vector<16x4xf32>
      %463 = arith.addf %453, %462 : vector<16x4xf32>
      %c6_i32_197 = arith.constant 6 : i32
      %464 = arith.addi %arg7, %c6_i32_197 : i32
      %465 = arith.index_cast %464 : i32 to index
      %c3_198 = arith.constant 3 : index
      %c0_199 = arith.constant 0 : index
      %466 = vector.load %arg6[%465, %c3_198, %c0_199] : memref<22x22x4xf32, #tpu.memory_space<vmem>>, vector<1x16x4xf32>
      %467 = vector.shape_cast %466 : vector<1x16x4xf32> to vector<16x4xf32>
      %c45 = arith.constant 45 : index
      %c0_200 = arith.constant 0 : index
      %468 = vector.load %arg3[%c45, %c0_200] : memref<49x4xf32, #tpu.memory_space<vmem>>, vector<1x4xf32>
      %469 = vector.shape_cast %468 : vector<1x4xf32> to vector<4xf32>
      %470 = vector.shape_cast %469 : vector<4xf32> to vector<1x4xf32>
      %471 = vector.broadcast %470 : vector<1x4xf32> to vector<16x4xf32>
      %472 = arith.mulf %467, %471 : vector<16x4xf32>
      %473 = arith.addf %463, %472 : vector<16x4xf32>
      %c6_i32_201 = arith.constant 6 : i32
      %474 = arith.addi %arg7, %c6_i32_201 : i32
      %475 = arith.index_cast %474 : i32 to index
      %c4_202 = arith.constant 4 : index
      %c0_203 = arith.constant 0 : index
      %476 = vector.load %arg6[%475, %c4_202, %c0_203] : memref<22x22x4xf32, #tpu.memory_space<vmem>>, vector<1x16x4xf32>
      %477 = vector.shape_cast %476 : vector<1x16x4xf32> to vector<16x4xf32>
      %c46 = arith.constant 46 : index
      %c0_204 = arith.constant 0 : index
      %478 = vector.load %arg3[%c46, %c0_204] : memref<49x4xf32, #tpu.memory_space<vmem>>, vector<1x4xf32>
      %479 = vector.shape_cast %478 : vector<1x4xf32> to vector<4xf32>
      %480 = vector.shape_cast %479 : vector<4xf32> to vector<1x4xf32>
      %481 = vector.broadcast %480 : vector<1x4xf32> to vector<16x4xf32>
      %482 = arith.mulf %477, %481 : vector<16x4xf32>
      %483 = arith.addf %473, %482 : vector<16x4xf32>
      %c6_i32_205 = arith.constant 6 : i32
      %484 = arith.addi %arg7, %c6_i32_205 : i32
      %485 = arith.index_cast %484 : i32 to index
      %c5_206 = arith.constant 5 : index
      %c0_207 = arith.constant 0 : index
      %486 = vector.load %arg6[%485, %c5_206, %c0_207] : memref<22x22x4xf32, #tpu.memory_space<vmem>>, vector<1x16x4xf32>
      %487 = vector.shape_cast %486 : vector<1x16x4xf32> to vector<16x4xf32>
      %c47 = arith.constant 47 : index
      %c0_208 = arith.constant 0 : index
      %488 = vector.load %arg3[%c47, %c0_208] : memref<49x4xf32, #tpu.memory_space<vmem>>, vector<1x4xf32>
      %489 = vector.shape_cast %488 : vector<1x4xf32> to vector<4xf32>
      %490 = vector.shape_cast %489 : vector<4xf32> to vector<1x4xf32>
      %491 = vector.broadcast %490 : vector<1x4xf32> to vector<16x4xf32>
      %492 = arith.mulf %487, %491 : vector<16x4xf32>
      %493 = arith.addf %483, %492 : vector<16x4xf32>
      %c6_i32_209 = arith.constant 6 : i32
      %494 = arith.addi %arg7, %c6_i32_209 : i32
      %495 = arith.index_cast %494 : i32 to index
      %c6_210 = arith.constant 6 : index
      %c0_211 = arith.constant 0 : index
      %496 = vector.load %arg6[%495, %c6_210, %c0_211] : memref<22x22x4xf32, #tpu.memory_space<vmem>>, vector<1x16x4xf32>
      %497 = vector.shape_cast %496 : vector<1x16x4xf32> to vector<16x4xf32>
      %c48 = arith.constant 48 : index
      %c0_212 = arith.constant 0 : index
      %498 = vector.load %arg3[%c48, %c0_212] : memref<49x4xf32, #tpu.memory_space<vmem>>, vector<1x4xf32>
      %499 = vector.shape_cast %498 : vector<1x4xf32> to vector<4xf32>
      %500 = vector.shape_cast %499 : vector<4xf32> to vector<1x4xf32>
      %501 = vector.broadcast %500 : vector<1x4xf32> to vector<16x4xf32>
      %502 = arith.mulf %497, %501 : vector<16x4xf32>
      %503 = arith.addf %493, %502 : vector<16x4xf32>
      %504 = arith.negf %503 : vector<16x4xf32>
      %505 = math.exp %504 : vector<16x4xf32>
      %cst_213 = arith.constant 1.000000e+00 : f32
      %506 = vector.broadcast %cst_213 : f32 to vector<16x4xf32>
      %507 = arith.addf %506, %505 : vector<16x4xf32>
      %508 = arith.divf %506, %507 : vector<16x4xf32>
      %509 = arith.mulf %503, %508 : vector<16x4xf32>
      %c0_214 = arith.constant 0 : index
      %510 = arith.index_cast %arg7 : i32 to index
      %c0_215 = arith.constant 0 : index
      %c0_216 = arith.constant 0 : index
      %511 = vector.load %arg5[%c0_214, %510, %c0_215, %c0_216] : memref<1x16x16x4xf32, #tpu.memory_space<vmem>>, vector<1x1x16x4xf32>
      %512 = vector.shape_cast %511 : vector<1x1x16x4xf32> to vector<16x4xf32>
      %513 = vector.shape_cast %509 : vector<16x4xf32> to vector<1x1x16x4xf32>
      tpu.vector_store %arg5[%c0_214, %510, %c0_215, %c0_216], %513 {strides = array<i32>} : memref<1x16x16x4xf32, #tpu.memory_space<vmem>>, vector<1x1x16x4xf32>,
    }
    %c16_i32_18 = arith.constant 16 : i32
    return
  }
  func.func @transform_0(%arg0: i32, %arg1: i32) -> (i32, i32, i32, i32) {
    %c0_i32 = arith.constant 0 : i32
    %c0_i32_0 = arith.constant 0 : i32
    %c0_i32_1 = arith.constant 0 : i32
    return %arg0, %c0_i32, %c0_i32_0, %arg1 : i32, i32, i32, i32
  }
  func.func @transform_1(%arg0: i32, %arg1: i32) -> (i32, i32) {
    %c0_i32 = arith.constant 0 : i32
    %c0_i32_0 = arith.constant 0 : i32
    return %c0_i32, %arg1 : i32, i32
  }
  func.func @transform_2(%arg0: i32, %arg1: i32) -> (i32, i32) {
    %c0_i32 = arith.constant 0 : i32
    %c0_i32_0 = arith.constant 0 : i32
    return %c0_i32, %arg1 : i32, i32
  }
  func.func @transform_3(%arg0: i32, %arg1: i32) -> (i32, i32, i32, i32) {
    %c0_i32 = arith.constant 0 : i32
    %c0_i32_0 = arith.constant 0 : i32
    %c0_i32_1 = arith.constant 0 : i32
    return %arg0, %c0_i32, %c0_i32_0, %arg1 : i32, i32, i32, i32
  }
}

</mosaic_0001>

<llo_original>
// kernel: tpu_custom_call.1
$region0: #{tpu_custom_call.1}
  #allocation0 [shape = 'u32[]', space=smem, size = 0x4, offset = 0x4, fixed_abs, tag = 'smem constant byte address 0x4 - core index']
  #allocation1 [shape = 'u32[144,128]{1,0:T(1,128)}', space=vmem, size = 0x12000, scoped, tag = 'internal scratch']
  #allocation2 [shape = 'f32[22,22,4]{2,1,0:T(8,128)}', space=vmem, size = 0x42000, scoped, tag = 'scratch operand']
  %s0 = inlined_call_operand.vmem [shape: f32[2,16,16,4], index: 0, kind: input, shape index: {}]
  %s1 = inlined_call_operand.vmem [shape: f32[49,4], index: 1, kind: input, shape index: {}]
  %s2 = inlined_call_operand.vmem [shape: f32[1,4], index: 2, kind: input, shape index: {}]
  %s3 = inlined_call_operand.vmem [shape: f32[2,16,16,4], index: 3, kind: output, shape index: {}]
  %s4 = sld [smem:[#allocation0]]
  $region59: #{tpu_custom_call.1} parent=0
    _
  %s6 = ssub.s32 1, %s4
  %s7 = scalar_select 0, %s6, %s4
  loop: start=0, step=1, limit=4
  $region2: #{tpu_custom_call.1} parent=0 // loop_pre_header
    _
  $region3: #{tpu_custom_call.1} parent=0 // loop_header
    %s9 = sphi 0, %s13
    %p10 = scmp.ge.s32.totalorder %s9, 4
    %s16 = sphi 0, %s28
    %s17 = sphi 0, %s24
    %s18 = sphi 0, %s16
    %s19 = sphi 0, %s17
    %s20 = sphi 0, %s18
    %s21 = sphi 0, %s19
    %s33 = sphi 0, %s35
    %s36 = sphi 0, %s33
    %s37 = sphi 0, %s36
    %s53 = sphi 0, %s37
    %s59 = sphi 0, %s61
    %s62 = sphi 0, %s59
    %s63 = sphi 0, %s62
    %s79 = sphi 0, %s63
    %s85 = sphi 0, %s87
    %s88 = sphi 0, %s85
    %s89 = sphi 0, %s88
    %s105 = sphi 0, %s89
    %s113 = sphi 0, %s115
    %s116 = sphi 0, %s113
    %s117 = sphi 0, %s116
    %s133 = sphi 0, %s117
  $region4: #{tpu_custom_call.1} parent=0 // loop_header_branch
    %12 = sbr.rel (%p10) target = $region8
  $region5: #{tpu_custom_call.1} parent=0 // loop_body
    %s14 = ssub.s32 %s9, 1
    %s15 = ssub.s32 %s9, 2
    %s22 = sadd.s32 1, %s17
    %p23 = scmp.ge.s32.totalorder %s22, 1
    %s24 = scalar_select %p23, 0, %s22
    %s25 = sadd.s32 1, %s16
    %s26 = scalar_select %p23, %s25, %s16
    %p27 = scmp.ge.s32.totalorder %s26, 2
    %s28 = scalar_select %p27, 0, %s26
    %s29 = ssub.s32 %s16, %s28
    %s30 = ssub.s32 %s17, %s24
    %s31 = sor.u32 %s29, %s30
    %p32 = scmp.eq.s32.totalorder %s31, 0
    %s34 = sadd.s32 %s33, 1
    %s35 = scalar_select %p32, %s33, %s34
    %p38 = pneg %p32
    %p39 = scmp.eq.s32.totalorder %s9, 1
    %p40 = por %p38, %p39
    %p41 = scmp.ne.s32.totalorder %s33, %s36
    %p42 = scmp.eq.s32.totalorder %s9, 0
    %p43 = por %p41, %p42
    %p44 = scmp.ne.s32.totalorder %s33, %s36
    %p45 = scmp.eq.s32.totalorder %s14, 1
    %p46 = por %p44, %p45
    %p47 = scmp.ne.s32.totalorder %s36, %s37
    %p48 = scmp.eq.s32.totalorder %s14, 0
    %p49 = por %p47, %p48
    %p50 = scmp.ne.s32.totalorder %s36, %s37
    %p51 = scmp.eq.s32.totalorder %s15, 1
    %p52 = por %p50, %p51
    %p54 = scmp.ne.s32.totalorder %s37, %s53
    %p55 = scmp.eq.s32.totalorder %s15, 0
    %p56 = por %p54, %p55
    %s57 = ssub.s32 %s17, %s24
    %p58 = scmp.eq.s32.totalorder %s57, 0
    %s60 = sadd.s32 %s59, 1
    %s61 = scalar_select %p58, %s59, %s60
    %p64 = pneg %p58
    %p65 = scmp.eq.s32.totalorder %s9, 1
    %p66 = por %p64, %p65
    %p67 = scmp.ne.s32.totalorder %s59, %s62
    %p68 = scmp.eq.s32.totalorder %s9, 0
    %p69 = por %p67, %p68
    %p70 = scmp.ne.s32.totalorder %s59, %s62
    %p71 = scmp.eq.s32.totalorder %s14, 1
    %p72 = por %p70, %p71
    %p73 = scmp.ne.s32.totalorder %s62, %s63
    %p74 = scmp.eq.s32.totalorder %s14, 0
    %p75 = por %p73, %p74
    %p76 = scmp.ne.s32.totalorder %s62, %s63
    %p77 = scmp.eq.s32.totalorder %s15, 1
    %p78 = por %p76, %p77
    %p80 = scmp.ne.s32.totalorder %s63, %s79
    %p81 = scmp.eq.s32.totalorder %s15, 0
    %p82 = por %p80, %p81
    %s83 = ssub.s32 %s17, %s24
    %p84 = scmp.eq.s32.totalorder %s83, 0
    %s86 = sadd.s32 %s85, 1
    %s87 = scalar_select %p84, %s85, %s86
    %p90 = pneg %p84
    %p91 = scmp.eq.s32.totalorder %s9, 1
    %p92 = por %p90, %p91
    %p93 = scmp.ne.s32.totalorder %s85, %s88
    %p94 = scmp.eq.s32.totalorder %s9, 0
    %p95 = por %p93, %p94
    %p96 = scmp.ne.s32.totalorder %s85, %s88
    %p97 = scmp.eq.s32.totalorder %s14, 1
    %p98 = por %p96, %p97
    %p99 = scmp.ne.s32.totalorder %s88, %s89
    %p100 = scmp.eq.s32.totalorder %s14, 0
    %p101 = por %p99, %p100
    %p102 = scmp.ne.s32.totalorder %s88, %s89
    %p103 = scmp.eq.s32.totalorder %s15, 1
    %p104 = por %p102, %p103
    %p106 = scmp.ne.s32.totalorder %s89, %s105
    %p107 = scmp.eq.s32.totalorder %s15, 0
    %p108 = por %p106, %p107
    %s109 = ssub.s32 %s16, %s28
    %s110 = ssub.s32 %s17, %s24
    %s111 = sor.u32 %s109, %s110
    %p112 = scmp.eq.s32.totalorder %s111, 0
    %s114 = sadd.s32 %s113, 1
    %s115 = scalar_select %p112, %s113, %s114
    %p118 = pneg %p112
    %p119 = scmp.eq.s32.totalorder %s9, 1
    %p120 = por %p118, %p119
    %p121 = scmp.ne.s32.totalorder %s113, %s116
    %p122 = scmp.eq.s32.totalorder %s9, 0
    %p123 = por %p121, %p122
    %p124 = scmp.ne.s32.totalorder %s113, %s116
    %p125 = scmp.eq.s32.totalorder %s14, 1
    %p126 = por %p124, %p125
    %p127 = scmp.ne.s32.totalorder %s116, %s117
    %p128 = scmp.eq.s32.totalorder %s14, 0
    %p129 = por %p127, %p128
    %p130 = scmp.ne.s32.totalorder %s116, %s117
    %p131 = scmp.eq.s32.totalorder %s15, 1
    %p132 = por %p130, %p131
    %p134 = scmp.ne.s32.totalorder %s117, %s133
    %p135 = scmp.eq.s32.totalorder %s15, 0
    %p136 = por %p134, %p135
    %p137 = scmp.le.s32.totalorder 1, %s9
    %p138 = scmp.lt.s32.totalorder %s9, 3
    %p139 = pnand %p137, %p138
    %p140 = pneg %p139
    // Predicated region
    $region9: #{tpu_custom_call.1} parent=5 // pred_check
      _
    $region10: #{tpu_custom_call.1} parent=5 // pred_check_branch
      %142 = sbr.rel (%p139) target = $region12
    $region11: #{tpu_custom_call.1} parent=5 // pred_region
      %s143 = ssub.s32 %s9, 1
      // Predicated region
      $region13: #{tpu_custom_call.1} parent=11 // pred_check
        %p144 = pneg %p75
      $region14: #{tpu_custom_call.1} parent=11 // pred_check_branch
        %146 = sbr.rel (%p144) target = $region16
      $region15: #{tpu_custom_call.1} parent=11 // pred_region
        %p147 = scmp.lt.s32.totalorder %s19, 0
        %s148 = scalar_select %p147, %s19, 0
        %s149 = smul.addr %s148, 8
        %s150 = scalar_lea.vmem %s1, %s149
      $region16: #{tpu_custom_call.1} parent=11 // pred_fallthru
        _
      // Predicated region
      $region17: #{tpu_custom_call.1} parent=11 // pred_check
        %p151 = pneg %p101
      $region18: #{tpu_custom_call.1} parent=11 // pred_check_branch
        %153 = sbr.rel (%p151) target = $region20
      $region19: #{tpu_custom_call.1} parent=11 // pred_region
        %p154 = scmp.lt.s32.totalorder %s19, 0
        %s155 = scalar_select %p154, %s19, 0
        %s156 = scalar_lea.vmem %s2, %s155
      $region20: #{tpu_custom_call.1} parent=11 // pred_fallthru
        _
    $region12: #{tpu_custom_call.1} parent=5 // pred_fallthru
      _
    %p157 = scmp.lt.s32.totalorder %s9, 2
    // Predicated region
    $region21: #{tpu_custom_call.1} parent=5 // pred_check
      %p158 = pneg %p157
    $region22: #{tpu_custom_call.1} parent=5 // pred_check_branch
      %160 = sbr.rel (%p158) target = $region24
    $region23: #{tpu_custom_call.1} parent=5 // pred_region
      // Predicated region
      $region25: #{tpu_custom_call.1} parent=23 // pred_check
        %p161 = pneg %p43
      $region26: #{tpu_custom_call.1} parent=23 // pred_check_branch
        %163 = sbr.rel (%p161) target = $region28
      $region27: #{tpu_custom_call.1} parent=23 // pred_region
        %p164 = scmp.lt.s32.totalorder %s16, 1
        %s165 = scalar_select %p164, %s16, 1
        %p166 = scmp.lt.s32.totalorder %s17, 0
        %s167 = scalar_select %p166, %s17, 0
        %s168 = smul.addr %s165, 32
        %s169 = sadd.s32 %s167, %s168
        %s170 = smul.addr %s169, 8
        %s171 = scalar_lea.vmem %s0, %s170
      $region28: #{tpu_custom_call.1} parent=23 // pred_fallthru
        _
    $region24: #{tpu_custom_call.1} parent=5 // pred_fallthru
      _
    %p172 = scmp.le.s32.totalorder 1, %s9
    %p173 = scmp.lt.s32.totalorder %s9, 3
    %p174 = pnand %p172, %p173
    %p175 = pneg %p174
    // Predicated region
    $region29: #{tpu_custom_call.1} parent=5 // pred_check
      _
    $region30: #{tpu_custom_call.1} parent=5 // pred_check_branch
      %177 = sbr.rel (%p174) target = $region32
    $region31: #{tpu_custom_call.1} parent=5 // pred_region
      %s178 = ssub.s32 %s9, 1
      %p179 = scmp.lt.s32.totalorder %s18, 1
      %s180 = scalar_select %p179, %s18, 1
      %p181 = scmp.lt.s32.totalorder %s19, 0
      %s182 = scalar_select %p181, %s19, 0
      %s183 = smul.addr %s180, 32
      %s184 = sadd.s32 %s182, %s183
      %s185 = smul.addr %s184, 8
      %s186 = scalar_lea.vmem %s0, %s185
      %p187 = pneg %p49
      %p188 = pneg %p46
      %p189 = scmp.lt.s32.totalorder %s19, 0
      %s190 = scalar_select %p189, %s19, 0
      %s191 = smul.addr %s190, 8
      %s192 = scalar_lea.vmem %s1, %s191
      %p193 = pneg %p75
      %p194 = pneg %p72
      %p195 = scmp.lt.s32.totalorder %s19, 0
      %s196 = scalar_select %p195, %s19, 0
      %s197 = scalar_lea.vmem %s2, %s196
      %p198 = pneg %p101
      %p199 = pneg %p98
      %p200 = pneg %p129
      %p201 = pneg %p126
      %p202 = scmp.lt.s32.totalorder %s18, 1
      %s203 = scalar_select %p202, %s18, 1
      %p204 = scmp.lt.s32.totalorder %s19, 0
      %s205 = scalar_select %p204, %s19, 0
      %s206 = smul.addr %s203, 32
      %s207 = sadd.s32 %s205, %s206
      %s208 = smul.addr %s207, 8
      %s209 = scalar_lea.vmem %s3, %s208
      %p210 = scmp.lt.s32.totalorder %s18, 1
      %s211 = scalar_select %p210, %s18, 1
      %p212 = scmp.lt.s32.totalorder %s19, 0
      %s213 = scalar_select %p212, %s19, 0
      %s214 = smul.addr %s211, 32
      %s215 = sadd.s32 %s213, %s214
      %s216 = smul.addr %s215, 8
      %s217 = scalar_lea.vmem %s0, %s216
      %p218 = scmp.lt.s32.totalorder %s19, 0
      %s219 = scalar_select %p218, %s19, 0
      %s220 = smul.addr %s219, 8
      %s221 = scalar_lea.vmem %s1, %s220
      %p222 = scmp.lt.s32.totalorder %s19, 0
      %s223 = scalar_select %p222, %s19, 0
      %s224 = scalar_lea.vmem %s2, %s223
      %p225 = scmp.lt.s32.totalorder %s18, 1
      %s226 = scalar_select %p225, %s18, 1
      %p227 = scmp.lt.s32.totalorder %s19, 0
      %s228 = scalar_select %p227, %s19, 0
      %s229 = smul.addr %s226, 32
      %s230 = sadd.s32 %s228, %s229
      %s231 = smul.addr %s230, 8
      %s232 = scalar_lea.vmem %s3, %s231
      %vm233 = vcmask 31744
      %234 = vst.msk [vmem:[#allocation2] sm:$0xff] %vm233, 0.0
      %235 = vst.msk [vmem:[#allocation2 + $0x8] sm:$0xff] %vm233, 0.0
      %vm236 = vcmask 29696
      %237 = vst.msk [vmem:[#allocation2 + $0x10] sm:$0x3f] %vm236, 0.0
      %238 = vst.msk [vmem:[#allocation2 + $0x18] sm:$0xff] %vm233, 0.0
      %239 = vst.msk [vmem:[#allocation2 + $0x20] sm:$0xff] %vm233, 0.0
      %240 = vst.msk [vmem:[#allocation2 + $0x28] sm:$0x3f] %vm236, 0.0
      %241 = vst.msk [vmem:[#allocation2 + $0x30] sm:$0xff] %vm233, 0.0
      %242 = vst.msk [vmem:[#allocation2 + $0x38] sm:$0xff] %vm233, 0.0
      %243 = vst.msk [vmem:[#allocation2 + $0x40] sm:$0x3f] %vm236, 0.0
      %s244 = scalar_lea.vmem [#allocation2], 456
      %245 = vst.msk [vmem:[%s244] sm:$0xff] %vm233, 0.0
      %246 = vst.msk [vmem:[%s244 + $0x8] sm:$0xff] %vm233, 0.0
      %247 = vst.msk [vmem:[%s244 + $0x10] sm:$0x3f] %vm236, 0.0
      %248 = vst.msk [vmem:[%s244 + $0x18] sm:$0xff] %vm233, 0.0
      %249 = vst.msk [vmem:[%s244 + $0x20] sm:$0xff] %vm233, 0.0
      %250 = vst.msk [vmem:[%s244 + $0x28] sm:$0x3f] %vm236, 0.0
      %251 = vst.msk [vmem:[%s244 + $0x30] sm:$0xff] %vm233, 0.0
      %252 = vst.msk [vmem:[%s244 + $0x38] sm:$0xff] %vm233, 0.0
      %253 = vst.msk [vmem:[%s244 + $0x40] sm:$0x3f] %vm236, 0.0
      %s254 = scalar_lea.vmem [#allocation2], 72
      %vm255 = vcmask 26624
      %256 = vst.msk [vmem:[%s254] sm:$0x7] %vm255, 0.0
      %257 = vst.msk [vmem:[%s254 + $0x18] sm:$0x7] %vm255, 0.0
      %258 = vst.msk [vmem:[%s254 + $0x30] sm:$0x7] %vm255, 0.0
      %259 = vst.msk [vmem:[%s254 + $0x48] sm:$0x7] %vm255, 0.0
      %260 = vst.msk [vmem:[%s254 + $0x60] sm:$0x7] %vm255, 0.0
      %261 = vst.msk [vmem:[%s254 + $0x78] sm:$0x7] %vm255, 0.0
      %262 = vst.msk [vmem:[%s254 + $0x90] sm:$0x7] %vm255, 0.0
      %263 = vst.msk [vmem:[%s254 + $0xa8] sm:$0x7] %vm255, 0.0
      %264 = vst.msk [vmem:[%s254 + $0xc0] sm:$0x7] %vm255, 0.0
      %265 = vst.msk [vmem:[%s254 + $0xd8] sm:$0x7] %vm255, 0.0
      %266 = vst.msk [vmem:[%s254 + $0xf0] sm:$0x7] %vm255, 0.0
      %267 = vst.msk [vmem:[%s254 + $0x108] sm:$0x7] %vm255, 0.0
      %268 = vst.msk [vmem:[%s254 + $0x120] sm:$0x7] %vm255, 0.0
      %269 = vst.msk [vmem:[%s254 + $0x138] sm:$0x7] %vm255, 0.0
      %270 = vst.msk [vmem:[%s254 + $0x150] sm:$0x7] %vm255, 0.0
      %271 = vst.msk [vmem:[%s254 + $0x168] sm:$0x7] %vm255, 0.0
      %272 = vst.msk [vmem:[%s254 + $0x13] sm:$0x7] %vm255, 0.0
      %273 = vst.msk [vmem:[%s254 + $0x2b] sm:$0x7] %vm255, 0.0
      %274 = vst.msk [vmem:[%s254 + $0x43] sm:$0x7] %vm255, 0.0
      %275 = vst.msk [vmem:[%s254 + $0x5b] sm:$0x7] %vm255, 0.0
      %276 = vst.msk [vmem:[%s254 + $0x73] sm:$0x7] %vm255, 0.0
      %277 = vst.msk [vmem:[%s254 + $0x8b] sm:$0x7] %vm255, 0.0
      %278 = vst.msk [vmem:[%s254 + $0xa3] sm:$0x7] %vm255, 0.0
      %279 = vst.msk [vmem:[%s254 + $0xbb] sm:$0x7] %vm255, 0.0
      %280 = vst.msk [vmem:[%s254 + $0xd3] sm:$0x7] %vm255, 0.0
      %281 = vst.msk [vmem:[%s254 + $0xeb] sm:$0x7] %vm255, 0.0
      %282 = vst.msk [vmem:[%s254 + $0x103] sm:$0x7] %vm255, 0.0
      %283 = vst.msk [vmem:[%s254 + $0x11b] sm:$0x7] %vm255, 0.0
      %284 = vst.msk [vmem:[%s254 + $0x133] sm:$0x7] %vm255, 0.0
      %285 = vst.msk [vmem:[%s254 + $0x14b] sm:$0x7] %vm255, 0.0
      %286 = vst.msk [vmem:[%s254 + $0x163] sm:$0x7] %vm255, 0.0
      %287 = vst.msk [vmem:[%s254 + $0x17b] sm:$0x7] %vm255, 0.0
      loop: start=0, step=1, limit=16
      $region33: #{tpu_custom_call.1} parent=31 // loop_pre_header
        _
      $region34: #{tpu_custom_call.1} parent=31 // loop_header
        %s289 = sphi 0, %s293
        %p290 = scmp.ge.s32.totalorder %s289, 16
      $region35: #{tpu_custom_call.1} parent=31 // loop_header_branch
        %292 = sbr.rel (%p290) target = $region39
      $region36: #{tpu_custom_call.1} parent=31 // loop_body
        %s294 = smul.u32 %s289, 16
        %s295 = scalar_lea.vmem %s217, %s294
        %v296 = vld [vmem:[%s295] sm:$0xff]
        %v297 = vld [vmem:[%s295 + $0x8] sm:$0xff]
        %s298 = sadd.s32 %s289, 3
        %s299 = smul.u32 %s298, 24
        %s300 = scalar_lea.vmem [#allocation2], %s299
        %301 = vst.msk [vmem:[%s300 + $0x3] sm:$0xff] %vm233, %v296
        %302 = vst.msk [vmem:[%s300 + $0xb] sm:$0xff] %vm233, %v297
      $region37: #{tpu_custom_call.1} parent=31 // loop_footer
        %s293 = sadd.s32 1, %s289
      $region38: #{tpu_custom_call.1} parent=31 // loop_footer_branch
        %288 = sbr.rel target = $region34
      $region39: #{tpu_custom_call.1} parent=31 // loop_exit
        _
      %v303 = vld [vmem:[%s224] sm:$0x1]
      %v305 = vlaneseq
      %v306 = vshrl.u32 %v305, 7
      %v307 = vsub.s32 0, %v306
      %v308 = vrot.slane %v303, %v307
      loop: start=0, step=1, limit=16
      $region40: #{tpu_custom_call.1} parent=31 // loop_pre_header
        _
      $region41: #{tpu_custom_call.1} parent=31 // loop_header
        %s311 = sphi 0, %s315
        %p312 = scmp.ge.s32.totalorder %s311, 16
      $region42: #{tpu_custom_call.1} parent=31 // loop_header_branch
        %314 = sbr.rel (%p312) target = $region46
      $region43: #{tpu_custom_call.1} parent=31 // loop_body
        %s316 = smul.u32 %s311, 24
        %s317 = scalar_lea.vmem [#allocation2], %s316
        %v318 = vld [vmem:[%s317] sm:$0xff]
        %v319 = vld [vmem:[%s317 + $0x8] sm:$0xff]
        %v320 = vld [vmem:[%s221] sm:$0x1]
        %v321 = vlaneseq
        %v322 = vshrl.u32 %v321, 7
        %v323 = vsub.s32 0, %v322
        %v324 = vrot.slane %v320, %v323
        %v325 = vmul.f32 %v318, %v324
        %v326 = vmul.f32 %v319, %v324
        %v327 = vadd.f32 %v308, %v325
        %v328 = vadd.f32 %v308, %v326
        %v329 = vld [vmem:[%s317 + $0x1] sm:$0xff]
        %v330 = vld [vmem:[%s317 + $0x9] sm:$0xff]
        %v331 = vld [vmem:[%s221 + $0x1] sm:$0x1]
        %v332 = vlaneseq
        %v333 = vshrl.u32 %v332, 7
        %v334 = vsub.s32 0, %v333
        %v335 = vrot.slane %v331, %v334
        %v336 = vmul.f32 %v329, %v335
        %v337 = vmul.f32 %v330, %v335
        %v338 = vadd.f32 %v327, %v336
        %v339 = vadd.f32 %v328, %v337
        %v340 = vld [vmem:[%s317 + $0x2] sm:$0xff]
        %v341 = vld [vmem:[%s317 + $0xa] sm:$0xff]
        %v342 = vld [vmem:[%s221 + $0x2] sm:$0x1]
        %v343 = vlaneseq
        %v344 = vshrl.u32 %v343, 7
        %v345 = vsub.s32 0, %v344
        %v346 = vrot.slane %v342, %v345
        %v347 = vmul.f32 %v340, %v346
        %v348 = vmul.f32 %v341, %v346
        %v349 = vadd.f32 %v338, %v347
        %v350 = vadd.f32 %v339, %v348
        %v351 = vld [vmem:[%s317 + $0x3] sm:$0xff]
        %v352 = vld [vmem:[%s317 + $0xb] sm:$0xff]
        %v353 = vld [vmem:[%s221 + $0x3] sm:$0x1]
        %v354 = vlaneseq
        %v355 = vshrl.u32 %v354, 7
        %v356 = vsub.s32 0, %v355
        %v357 = vrot.slane %v353, %v356
        %v358 = vmul.f32 %v351, %v357
        %v359 = vmul.f32 %v352, %v357
        %v360 = vadd.f32 %v349, %v358
        %v361 = vadd.f32 %v350, %v359
        %v362 = vld [vmem:[%s317 + $0x4] sm:$0xff]
        %v363 = vld [vmem:[%s317 + $0xc] sm:$0xff]
        %v364 = vld [vmem:[%s221 + $0x4] sm:$0x1]
        %v365 = vlaneseq
        %v366 = vshrl.u32 %v365, 7
        %v367 = vsub.s32 0, %v366
        %v368 = vrot.slane %v364, %v367
        %v369 = vmul.f32 %v362, %v368
        %v370 = vmul.f32 %v363, %v368
        %v371 = vadd.f32 %v360, %v369
        %v372 = vadd.f32 %v361, %v370
        %v373 = vld [vmem:[%s317 + $0x5] sm:$0xff]
        %v374 = vld [vmem:[%s317 + $0xd] sm:$0xff]
        %v375 = vld [vmem:[%s221 + $0x5] sm:$0x1]
        %v376 = vlaneseq
        %v377 = vshrl.u32 %v376, 7
        %v378 = vsub.s32 0, %v377
        %v379 = vrot.slane %v375, %v378
        %v380 = vmul.f32 %v373, %v379
        %v381 = vmul.f32 %v374, %v379
        %v382 = vadd.f32 %v371, %v380
        %v383 = vadd.f32 %v372, %v381
        %v384 = vld [vmem:[%s317 + $0x6] sm:$0xff]
        %v385 = vld [vmem:[%s317 + $0xe] sm:$0xff]
        %v386 = vld [vmem:[%s221 + $0x6] sm:$0x1]
        %v387 = vlaneseq
        %v388 = vshrl.u32 %v387, 7
        %v389 = vsub.s32 0, %v388
        %v390 = vrot.slane %v386, %v389
        %v391 = vmul.f32 %v384, %v390
        %v392 = vmul.f32 %v385, %v390
        %v393 = vadd.f32 %v382, %v391
        %v394 = vadd.f32 %v383, %v392
        %s395 = sadd.s32 %s311, 1
        %s396 = smul.u32 %s395, 24
        %s397 = scalar_lea.vmem [#allocation2], %s396
        %v398 = vld [vmem:[%s397] sm:$0xff]
        %v399 = vld [vmem:[%s397 + $0x8] sm:$0xff]
        %v400 = vld [vmem:[%s221 + $0x7] sm:$0x1]
        %v401 = vlaneseq
        %v402 = vshrl.u32 %v401, 7
        %v403 = vsub.s32 0, %v402
        %v404 = vrot.slane %v400, %v403
        %v405 = vmul.f32 %v398, %v404
        %v406 = vmul.f32 %v399, %v404
        %v407 = vadd.f32 %v393, %v405
        %v408 = vadd.f32 %v394, %v406
        %v409 = vld [vmem:[%s397 + $0x1] sm:$0xff]
        %v410 = vld [vmem:[%s397 + $0x9] sm:$0xff]
        %v411 = vld [vmem:[%s221 + $0x8] sm:$0x1]
        %v412 = vlaneseq
        %v413 = vshrl.u32 %v412, 7
        %v414 = vsub.s32 0, %v413
        %v415 = vrot.slane %v411, %v414
        %v416 = vmul.f32 %v409, %v415
        %v417 = vmul.f32 %v410, %v415
        %v418 = vadd.f32 %v407, %v416
        %v419 = vadd.f32 %v408, %v417
        %v420 = vld [vmem:[%s397 + $0x2] sm:$0xff]
        %v421 = vld [vmem:[%s397 + $0xa] sm:$0xff]
        %v422 = vld [vmem:[%s221 + $0x9] sm:$0x1]
        %v423 = vlaneseq
        %v424 = vshrl.u32 %v423, 7
        %v425 = vsub.s32 0, %v424
        %v426 = vrot.slane %v422, %v425
        %v427 = vmul.f32 %v420, %v426
        %v428 = vmul.f32 %v421, %v426
        %v429 = vadd.f32 %v418, %v427
        %v430 = vadd.f32 %v419, %v428
        %v431 = vld [vmem:[%s397 + $0x3] sm:$0xff]
        %v432 = vld [vmem:[%s397 + $0xb] sm:$0xff]
        %v433 = vld [vmem:[%s221 + $0xa] sm:$0x1]
        %v434 = vlaneseq
        %v435 = vshrl.u32 %v434, 7
        %v436 = vsub.s32 0, %v435
        %v437 = vrot.slane %v433, %v436
        %v438 = vmul.f32 %v431, %v437
        %v439 = vmul.f32 %v432, %v437
        %v440 = vadd.f32 %v429, %v438
        %v441 = vadd.f32 %v430, %v439
        %v442 = vld [vmem:[%s397 + $0x4] sm:$0xff]
        %v443 = vld [vmem:[%s397 + $0xc] sm:$0xff]
        %v444 = vld [vmem:[%s221 + $0xb] sm:$0x1]
        %v445 = vlaneseq
        %v446 = vshrl.u32 %v445, 7
        %v447 = vsub.s32 0, %v446
        %v448 = vrot.slane %v444, %v447
        %v449 = vmul.f32 %v442, %v448
        %v450 = vmul.f32 %v443, %v448
        %v451 = vadd.f32 %v440, %v449
        %v452 = vadd.f32 %v441, %v450
        %v453 = vld [vmem:[%s397 + $0x5] sm:$0xff]
        %v454 = vld [vmem:[%s397 + $0xd] sm:$0xff]
        %v455 = vld [vmem:[%s221 + $0xc] sm:$0x1]
        %v456 = vlaneseq
        %v457 = vshrl.u32 %v456, 7
        %v458 = vsub.s32 0, %v457
        %v459 = vrot.slane %v455, %v458
        %v460 = vmul.f32 %v453, %v459
        %v461 = vmul.f32 %v454, %v459
        %v462 = vadd.f32 %v451, %v460
        %v463 = vadd.f32 %v452, %v461
        %v464 = vld [vmem:[%s397 + $0x6] sm:$0xff]
        %v465 = vld [vmem:[%s397 + $0xe] sm:$0xff]
        %v466 = vld [vmem:[%s221 + $0xd] sm:$0x1]
        %v467 = vlaneseq
        %v468 = vshrl.u32 %v467, 7
        %v469 = vsub.s32 0, %v468
        %v470 = vrot.slane %v466, %v469
        %v471 = vmul.f32 %v464, %v470
        %v472 = vmul.f32 %v465, %v470
        %v473 = vadd.f32 %v462, %v471
        %v474 = vadd.f32 %v463, %v472
        %s475 = sadd.s32 %s311, 2
        %s476 = smul.u32 %s475, 24
        %s477 = scalar_lea.vmem [#allocation2], %s476
        %v478 = vld [vmem:[%s477] sm:$0xff]
        %v479 = vld [vmem:[%s477 + $0x8] sm:$0xff]
        %v480 = vld [vmem:[%s221 + $0xe] sm:$0x1]
        %v481 = vlaneseq
        %v482 = vshrl.u32 %v481, 7
        %v483 = vsub.s32 0, %v482
        %v484 = vrot.slane %v480, %v483
        %v485 = vmul.f32 %v478, %v484
        %v486 = vmul.f32 %v479, %v484
        %v487 = vadd.f32 %v473, %v485
        %v488 = vadd.f32 %v474, %v486
        %v489 = vld [vmem:[%s477 + $0x1] sm:$0xff]
        %v490 = vld [vmem:[%s477 + $0x9] sm:$0xff]
        %v491 = vld [vmem:[%s221 + $0xf] sm:$0x1]
        %v492 = vlaneseq
        %v493 = vshrl.u32 %v492, 7
        %v494 = vsub.s32 0, %v493
        %v495 = vrot.slane %v491, %v494
        %v496 = vmul.f32 %v489, %v495
        %v497 = vmul.f32 %v490, %v495
        %v498 = vadd.f32 %v487, %v496
        %v499 = vadd.f32 %v488, %v497
        %v500 = vld [vmem:[%s477 + $0x2] sm:$0xff]
        %v501 = vld [vmem:[%s477 + $0xa] sm:$0xff]
        %v502 = vld [vmem:[%s221 + $0x10] sm:$0x1]
        %v503 = vlaneseq
        %v504 = vshrl.u32 %v503, 7
        %v505 = vsub.s32 0, %v504
        %v506 = vrot.slane %v502, %v505
        %v507 = vmul.f32 %v500, %v506
        %v508 = vmul.f32 %v501, %v506
        %v509 = vadd.f32 %v498, %v507
        %v510 = vadd.f32 %v499, %v508
        %v511 = vld [vmem:[%s477 + $0x3] sm:$0xff]
        %v512 = vld [vmem:[%s477 + $0xb] sm:$0xff]
        %v513 = vld [vmem:[%s221 + $0x11] sm:$0x1]
        %v514 = vlaneseq
        %v515 = vshrl.u32 %v514, 7
        %v516 = vsub.s32 0, %v515
        %v517 = vrot.slane %v513, %v516
        %v518 = vmul.f32 %v511, %v517
        %v519 = vmul.f32 %v512, %v517
        %v520 = vadd.f32 %v509, %v518
        %v521 = vadd.f32 %v510, %v519
        %v522 = vld [vmem:[%s477 + $0x4] sm:$0xff]
        %v523 = vld [vmem:[%s477 + $0xc] sm:$0xff]
        %v524 = vld [vmem:[%s221 + $0x12] sm:$0x1]
        %v525 = vlaneseq
        %v526 = vshrl.u32 %v525, 7
        %v527 = vsub.s32 0, %v526
        %v528 = vrot.slane %v524, %v527
        %v529 = vmul.f32 %v522, %v528
        %v530 = vmul.f32 %v523, %v528
        %v531 = vadd.f32 %v520, %v529
        %v532 = vadd.f32 %v521, %v530
        %v533 = vld [vmem:[%s477 + $0x5] sm:$0xff]
        %v534 = vld [vmem:[%s477 + $0xd] sm:$0xff]
        %v535 = vld [vmem:[%s221 + $0x13] sm:$0x1]
        %v536 = vlaneseq
        %v537 = vshrl.u32 %v536, 7
        %v538 = vsub.s32 0, %v537
        %v539 = vrot.slane %v535, %v538
        %v540 = vmul.f32 %v533, %v539
        %v541 = vmul.f32 %v534, %v539
        %v542 = vadd.f32 %v531, %v540
        %v543 = vadd.f32 %v532, %v541
        %v544 = vld [vmem:[%s477 + $0x6] sm:$0xff]
        %v545 = vld [vmem:[%s477 + $0xe] sm:$0xff]
        %v546 = vld [vmem:[%s221 + $0x14] sm:$0x1]
        %v547 = vlaneseq
        %v548 = vshrl.u32 %v547, 7
        %v549 = vsub.s32 0, %v548
        %v550 = vrot.slane %v546, %v549
        %v551 = vmul.f32 %v544, %v550
        %v552 = vmul.f32 %v545, %v550
        %v553 = vadd.f32 %v542, %v551
        %v554 = vadd.f32 %v543, %v552
        %s555 = sadd.s32 %s311, 3
        %s556 = smul.u32 %s555, 24
        %s557 = scalar_lea.vmem [#allocation2], %s556
        %v558 = vld [vmem:[%s557] sm:$0xff]
        %v559 = vld [vmem:[%s557 + $0x8] sm:$0xff]
        %v560 = vld [vmem:[%s221 + $0x15] sm:$0x1]
        %v561 = vlaneseq
        %v562 = vshrl.u32 %v561, 7
        %v563 = vsub.s32 0, %v562
        %v564 = vrot.slane %v560, %v563
        %v565 = vmul.f32 %v558, %v564
        %v566 = vmul.f32 %v559, %v564
        %v567 = vadd.f32 %v553, %v565
        %v568 = vadd.f32 %v554, %v566
        %v569 = vld [vmem:[%s557 + $0x1] sm:$0xff]
        %v570 = vld [vmem:[%s557 + $0x9] sm:$0xff]
        %v571 = vld [vmem:[%s221 + $0x16] sm:$0x1]
        %v572 = vlaneseq
        %v573 = vshrl.u32 %v572, 7
        %v574 = vsub.s32 0, %v573
        %v575 = vrot.slane %v571, %v574
        %v576 = vmul.f32 %v569, %v575
        %v577 = vmul.f32 %v570, %v575
        %v578 = vadd.f32 %v567, %v576
        %v579 = vadd.f32 %v568, %v577
        %v580 = vld [vmem:[%s557 + $0x2] sm:$0xff]
        %v581 = vld [vmem:[%s557 + $0xa] sm:$0xff]
        %v582 = vld [vmem:[%s221 + $0x17] sm:$0x1]
        %v583 = vlaneseq
        %v584 = vshrl.u32 %v583, 7
        %v585 = vsub.s32 0, %v584
        %v586 = vrot.slane %v582, %v585
        %v587 = vmul.f32 %v580, %v586
        %v588 = vmul.f32 %v581, %v586
        %v589 = vadd.f32 %v578, %v587
        %v590 = vadd.f32 %v579, %v588
        %v591 = vld [vmem:[%s557 + $0x3] sm:$0xff]
        %v592 = vld [vmem:[%s557 + $0xb] sm:$0xff]
        %v593 = vld [vmem:[%s221 + $0x18] sm:$0x1]
        %v594 = vlaneseq
        %v595 = vshrl.u32 %v594, 7
        %v596 = vsub.s32 0, %v595
        %v597 = vrot.slane %v593, %v596
        %v598 = vmul.f32 %v591, %v597
        %v599 = vmul.f32 %v592, %v597
        %v600 = vadd.f32 %v589, %v598
        %v601 = vadd.f32 %v590, %v599
        %v602 = vld [vmem:[%s557 + $0x4] sm:$0xff]
        %v603 = vld [vmem:[%s557 + $0xc] sm:$0xff]
        %v604 = vld [vmem:[%s221 + $0x19] sm:$0x1]
        %v605 = vlaneseq
        %v606 = vshrl.u32 %v605, 7
        %v607 = vsub.s32 0, %v606
        %v608 = vrot.slane %v604, %v607
        %v609 = vmul.f32 %v602, %v608
        %v610 = vmul.f32 %v603, %v608
        %v611 = vadd.f32 %v600, %v609
        %v612 = vadd.f32 %v601, %v610
        %v613 = vld [vmem:[%s557 + $0x5] sm:$0xff]
        %v614 = vld [vmem:[%s557 + $0xd] sm:$0xff]
        %v615 = vld [vmem:[%s221 + $0x1a] sm:$0x1]
        %v616 = vlaneseq
        %v617 = vshrl.u32 %v616, 7
        %v618 = vsub.s32 0, %v617
        %v619 = vrot.slane %v615, %v618
        %v620 = vmul.f32 %v613, %v619
        %v621 = vmul.f32 %v614, %v619
        %v622 = vadd.f32 %v611, %v620
        %v623 = vadd.f32 %v612, %v621
        %v624 = vld [vmem:[%s557 + $0x6] sm:$0xff]
        %v625 = vld [vmem:[%s557 + $0xe] sm:$0xff]
        %v626 = vld [vmem:[%s221 + $0x1b] sm:$0x1]
        %v627 = vlaneseq
        %v628 = vshrl.u32 %v627, 7
        %v629 = vsub.s32 0, %v628
        %v630 = vrot.slane %v626, %v629
        %v631 = vmul.f32 %v624, %v630
        %v632 = vmul.f32 %v625, %v630
        %v633 = vadd.f32 %v622, %v631
        %v634 = vadd.f32 %v623, %v632
        %s635 = sadd.s32 %s311, 4
        %s636 = smul.u32 %s635, 24
        %s637 = scalar_lea.vmem [#allocation2], %s636
        %v638 = vld [vmem:[%s637] sm:$0xff]
        %v639 = vld [vmem:[%s637 + $0x8] sm:$0xff]
        %v640 = vld [vmem:[%s221 + $0x1c] sm:$0x1]
        %v641 = vlaneseq
        %v642 = vshrl.u32 %v641, 7
        %v643 = vsub.s32 0, %v642
        %v644 = vrot.slane %v640, %v643
        %v645 = vmul.f32 %v638, %v644
        %v646 = vmul.f32 %v639, %v644
        %v647 = vadd.f32 %v633, %v645
        %v648 = vadd.f32 %v634, %v646
        %v649 = vld [vmem:[%s637 + $0x1] sm:$0xff]
        %v650 = vld [vmem:[%s637 + $0x9] sm:$0xff]
        %v651 = vld [vmem:[%s221 + $0x1d] sm:$0x1]
        %v652 = vlaneseq
        %v653 = vshrl.u32 %v652, 7
        %v654 = vsub.s32 0, %v653
        %v655 = vrot.slane %v651, %v654
        %v656 = vmul.f32 %v649, %v655
        %v657 = vmul.f32 %v650, %v655
        %v658 = vadd.f32 %v647, %v656
        %v659 = vadd.f32 %v648, %v657
        %v660 = vld [vmem:[%s637 + $0x2] sm:$0xff]
        %v661 = vld [vmem:[%s637 + $0xa] sm:$0xff]
        %v662 = vld [vmem:[%s221 + $0x1e] sm:$0x1]
        %v663 = vlaneseq
        %v664 = vshrl.u32 %v663, 7
        %v665 = vsub.s32 0, %v664
        %v666 = vrot.slane %v662, %v665
        %v667 = vmul.f32 %v660, %v666
        %v668 = vmul.f32 %v661, %v666
        %v669 = vadd.f32 %v658, %v667
        %v670 = vadd.f32 %v659, %v668
        %v671 = vld [vmem:[%s637 + $0x3] sm:$0xff]
        %v672 = vld [vmem:[%s637 + $0xb] sm:$0xff]
        %v673 = vld [vmem:[%s221 + $0x1f] sm:$0x1]
        %v674 = vlaneseq
        %v675 = vshrl.u32 %v674, 7
        %v676 = vsub.s32 0, %v675
        %v677 = vrot.slane %v673, %v676
        %v678 = vmul.f32 %v671, %v677
        %v679 = vmul.f32 %v672, %v677
        %v680 = vadd.f32 %v669, %v678
        %v681 = vadd.f32 %v670, %v679
        %v682 = vld [vmem:[%s637 + $0x4] sm:$0xff]
        %v683 = vld [vmem:[%s637 + $0xc] sm:$0xff]
        %v684 = vld [vmem:[%s221 + $0x20] sm:$0x1]
        %v685 = vlaneseq
        %v686 = vshrl.u32 %v685, 7
        %v687 = vsub.s32 0, %v686
        %v688 = vrot.slane %v684, %v687
        %v689 = vmul.f32 %v682, %v688
        %v690 = vmul.f32 %v683, %v688
        %v691 = vadd.f32 %v680, %v689
        %v692 = vadd.f32 %v681, %v690
        %v693 = vld [vmem:[%s637 + $0x5] sm:$0xff]
        %v694 = vld [vmem:[%s637 + $0xd] sm:$0xff]
        %v695 = vld [vmem:[%s221 + $0x21] sm:$0x1]
        %v696 = vlaneseq
        %v697 = vshrl.u32 %v696, 7
        %v698 = vsub.s32 0, %v697
        %v699 = vrot.slane %v695, %v698
        %v700 = vmul.f32 %v693, %v699
        %v701 = vmul.f32 %v694, %v699
        %v702 = vadd.f32 %v691, %v700
        %v703 = vadd.f32 %v692, %v701
        %v704 = vld [vmem:[%s637 + $0x6] sm:$0xff]
        %v705 = vld [vmem:[%s637 + $0xe] sm:$0xff]
        %v706 = vld [vmem:[%s221 + $0x22] sm:$0x1]
        %v707 = vlaneseq
        %v708 = vshrl.u32 %v707, 7
        %v709 = vsub.s32 0, %v708
        %v710 = vrot.slane %v706, %v709
        %v711 = vmul.f32 %v704, %v710
        %v712 = vmul.f32 %v705, %v710
        %v713 = vadd.f32 %v702, %v711
        %v714 = vadd.f32 %v703, %v712
        %s715 = sadd.s32 %s311, 5
        %s716 = smul.u32 %s715, 24
        %s717 = scalar_lea.vmem [#allocation2], %s716
        %v718 = vld [vmem:[%s717] sm:$0xff]
        %v719 = vld [vmem:[%s717 + $0x8] sm:$0xff]
        %v720 = vld [vmem:[%s221 + $0x23] sm:$0x1]
        %v721 = vlaneseq
        %v722 = vshrl.u32 %v721, 7
        %v723 = vsub.s32 0, %v722
        %v724 = vrot.slane %v720, %v723
        %v725 = vmul.f32 %v718, %v724
        %v726 = vmul.f32 %v719, %v724
        %v727 = vadd.f32 %v713, %v725
        %v728 = vadd.f32 %v714, %v726
        %v729 = vld [vmem:[%s717 + $0x1] sm:$0xff]
        %v730 = vld [vmem:[%s717 + $0x9] sm:$0xff]
        %v731 = vld [vmem:[%s221 + $0x24] sm:$0x1]
        %v732 = vlaneseq
        %v733 = vshrl.u32 %v732, 7
        %v734 = vsub.s32 0, %v733
        %v735 = vrot.slane %v731, %v734
        %v736 = vmul.f32 %v729, %v735
        %v737 = vmul.f32 %v730, %v735
        %v738 = vadd.f32 %v727, %v736
        %v739 = vadd.f32 %v728, %v737
        %v740 = vld [vmem:[%s717 + $0x2] sm:$0xff]
        %v741 = vld [vmem:[%s717 + $0xa] sm:$0xff]
        %v742 = vld [vmem:[%s221 + $0x25] sm:$0x1]
        %v743 = vlaneseq
        %v744 = vshrl.u32 %v743, 7
        %v745 = vsub.s32 0, %v744
        %v746 = vrot.slane %v742, %v745
        %v747 = vmul.f32 %v740, %v746
        %v748 = vmul.f32 %v741, %v746
        %v749 = vadd.f32 %v738, %v747
        %v750 = vadd.f32 %v739, %v748
        %v751 = vld [vmem:[%s717 + $0x3] sm:$0xff]
        %v752 = vld [vmem:[%s717 + $0xb] sm:$0xff]
        %v753 = vld [vmem:[%s221 + $0x26] sm:$0x1]
        %v754 = vlaneseq
        %v755 = vshrl.u32 %v754, 7
        %v756 = vsub.s32 0, %v755
        %v757 = vrot.slane %v753, %v756
        %v758 = vmul.f32 %v751, %v757
        %v759 = vmul.f32 %v752, %v757
        %v760 = vadd.f32 %v749, %v758
        %v761 = vadd.f32 %v750, %v759
        %v762 = vld [vmem:[%s717 + $0x4] sm:$0xff]
        %v763 = vld [vmem:[%s717 + $0xc] sm:$0xff]
        %v764 = vld [vmem:[%s221 + $0x27] sm:$0x1]
        %v765 = vlaneseq
        %v766 = vshrl.u32 %v765, 7
        %v767 = vsub.s32 0, %v766
        %v768 = vrot.slane %v764, %v767
        %v769 = vmul.f32 %v762, %v768
        %v770 = vmul.f32 %v763, %v768
        %v771 = vadd.f32 %v760, %v769
        %v772 = vadd.f32 %v761, %v770
        %v773 = vld [vmem:[%s717 + $0x5] sm:$0xff]
        %v774 = vld [vmem:[%s717 + $0xd] sm:$0xff]
        %v775 = vld [vmem:[%s221 + $0x28] sm:$0x1]
        %v776 = vlaneseq
        %v777 = vshrl.u32 %v776, 7
        %v778 = vsub.s32 0, %v777
        %v779 = vrot.slane %v775, %v778
        %v780 = vmul.f32 %v773, %v779
        %v781 = vmul.f32 %v774, %v779
        %v782 = vadd.f32 %v771, %v780
        %v783 = vadd.f32 %v772, %v781
        %v784 = vld [vmem:[%s717 + $0x6] sm:$0xff]
        %v785 = vld [vmem:[%s717 + $0xe] sm:$0xff]
        %v786 = vld [vmem:[%s221 + $0x29] sm:$0x1]
        %v787 = vlaneseq
        %v788 = vshrl.u32 %v787, 7
        %v789 = vsub.s32 0, %v788
        %v790 = vrot.slane %v786, %v789
        %v791 = vmul.f32 %v784, %v790
        %v792 = vmul.f32 %v785, %v790
        %v793 = vadd.f32 %v782, %v791
        %v794 = vadd.f32 %v783, %v792
        %s795 = sadd.s32 %s311, 6
        %s796 = smul.u32 %s795, 24
        %s797 = scalar_lea.vmem [#allocation2], %s796
        %v798 = vld [vmem:[%s797] sm:$0xff]
        %v799 = vld [vmem:[%s797 + $0x8] sm:$0xff]
        %v800 = vld [vmem:[%s221 + $0x2a] sm:$0x1]
        %v801 = vlaneseq
        %v802 = vshrl.u32 %v801, 7
        %v803 = vsub.s32 0, %v802
        %v804 = vrot.slane %v800, %v803
        %v805 = vmul.f32 %v798, %v804
        %v806 = vmul.f32 %v799, %v804
        %v807 = vadd.f32 %v793, %v805
        %v808 = vadd.f32 %v794, %v806
        %v809 = vld [vmem:[%s797 + $0x1] sm:$0xff]
        %v810 = vld [vmem:[%s797 + $0x9] sm:$0xff]
        %v811 = vld [vmem:[%s221 + $0x2b] sm:$0x1]
        %v812 = vlaneseq
        %v813 = vshrl.u32 %v812, 7
        %v814 = vsub.s32 0, %v813
        %v815 = vrot.slane %v811, %v814
        %v816 = vmul.f32 %v809, %v815
        %v817 = vmul.f32 %v810, %v815
        %v818 = vadd.f32 %v807, %v816
        %v819 = vadd.f32 %v808, %v817
        %v820 = vld [vmem:[%s797 + $0x2] sm:$0xff]
        %v821 = vld [vmem:[%s797 + $0xa] sm:$0xff]
        %v822 = vld [vmem:[%s221 + $0x2c] sm:$0x1]
        %v823 = vlaneseq
        %v824 = vshrl.u32 %v823, 7
        %v825 = vsub.s32 0, %v824
        %v826 = vrot.slane %v822, %v825
        %v827 = vmul.f32 %v820, %v826
        %v828 = vmul.f32 %v821, %v826
        %v829 = vadd.f32 %v818, %v827
        %v830 = vadd.f32 %v819, %v828
        %v831 = vld [vmem:[%s797 + $0x3] sm:$0xff]
        %v832 = vld [vmem:[%s797 + $0xb] sm:$0xff]
        %v833 = vld [vmem:[%s221 + $0x2d] sm:$0x1]
        %v834 = vlaneseq
        %v835 = vshrl.u32 %v834, 7
        %v836 = vsub.s32 0, %v835
        %v837 = vrot.slane %v833, %v836
        %v838 = vmul.f32 %v831, %v837
        %v839 = vmul.f32 %v832, %v837
        %v840 = vadd.f32 %v829, %v838
        %v841 = vadd.f32 %v830, %v839
        %v842 = vld [vmem:[%s797 + $0x4] sm:$0xff]
        %v843 = vld [vmem:[%s797 + $0xc] sm:$0xff]
        %v844 = vld [vmem:[%s221 + $0x2e] sm:$0x1]
        %v845 = vlaneseq
        %v846 = vshrl.u32 %v845, 7
        %v847 = vsub.s32 0, %v846
        %v848 = vrot.slane %v844, %v847
        %v849 = vmul.f32 %v842, %v848
        %v850 = vmul.f32 %v843, %v848
        %v851 = vadd.f32 %v840, %v849
        %v852 = vadd.f32 %v841, %v850
        %v853 = vld [vmem:[%s797 + $0x5] sm:$0xff]
        %v854 = vld [vmem:[%s797 + $0xd] sm:$0xff]
        %v855 = vld [vmem:[%s221 + $0x2f] sm:$0x1]
        %v856 = vlaneseq
        %v857 = vshrl.u32 %v856, 7
        %v858 = vsub.s32 0, %v857
        %v859 = vrot.slane %v855, %v858
        %v860 = vmul.f32 %v853, %v859
        %v861 = vmul.f32 %v854, %v859
        %v862 = vadd.f32 %v851, %v860
        %v863 = vadd.f32 %v852, %v861
        %v864 = vld [vmem:[%s797 + $0x6] sm:$0xff]
        %v865 = vld [vmem:[%s797 + $0xe] sm:$0xff]
        %v866 = vld [vmem:[%s221 + $0x30] sm:$0x1]
        %v867 = vlaneseq
        %v868 = vshrl.u32 %v867, 7
        %v869 = vsub.s32 0, %v868
        %v870 = vrot.slane %v866, %v869
        %v871 = vmul.f32 %v864, %v870
        %v872 = vmul.f32 %v865, %v870
        %v873 = vadd.f32 %v862, %v871
        %v874 = vadd.f32 %v863, %v872
        %v875 = vxor.u32 %v873, 2147483648
        %v876 = vxor.u32 %v874, 2147483648
        %v877 = vmul.f32 %v875, 1.442695
        %v878 = vpow.pop %v877
        %v879 = vmul.f32 %v876, 1.442695
        %v880 = vpow.pop %v879
        %v881 = vadd.f32 %v878, 1.0
        %v882 = vadd.f32 %v880, 1.0
        %v883 = vrcp.pop %v881
        %v884 = vmul.f32 1.0, %v883
        %v885 = vrcp.pop %v882
        %v886 = vmul.f32 1.0, %v885
        %v887 = vmul.f32 %v873, %v884
        %v888 = vmul.f32 %v874, %v886
        %s889 = smul.u32 %s311, 16
        %s890 = scalar_lea.vmem %s232, %s889
        %891 = vst.msk [vmem:[%s890] sm:$0xff] %vm233, %v887
        %892 = vst.msk [vmem:[%s890 + $0x8] sm:$0xff] %vm233, %v888
      $region44: #{tpu_custom_call.1} parent=31 // loop_footer
        %s315 = sadd.s32 1, %s311
      $region45: #{tpu_custom_call.1} parent=31 // loop_footer_branch
        %310 = sbr.rel target = $region41
      $region46: #{tpu_custom_call.1} parent=31 // loop_exit
        _
      %p893 = scmp.lt.s32.totalorder %s18, 1
      %s894 = scalar_select %p893, %s18, 1
      %p895 = scmp.lt.s32.totalorder %s19, 0
      %s896 = scalar_select %p895, %s19, 0
      %s897 = smul.addr %s894, 32
      %s898 = sadd.s32 %s896, %s897
      %s899 = smul.addr %s898, 8
      %s900 = scalar_lea.vmem %s3, %s899
      // Predicated region
      $region47: #{tpu_custom_call.1} parent=31 // pred_check
        %p901 = pneg %p126
      $region48: #{tpu_custom_call.1} parent=31 // pred_check_branch
        %903 = sbr.rel (%p901) target = $region50
      $region49: #{tpu_custom_call.1} parent=31 // pred_region
        _
      $region50: #{tpu_custom_call.1} parent=31 // pred_fallthru
        _
    $region32: #{tpu_custom_call.1} parent=5 // pred_fallthru
      _
    %p904 = scmp.le.s32.totalorder 2, %s9
    // Predicated region
    $region51: #{tpu_custom_call.1} parent=5 // pred_check
      %p905 = pneg %p904
    $region52: #{tpu_custom_call.1} parent=5 // pred_check_branch
      %907 = sbr.rel (%p905) target = $region54
    $region53: #{tpu_custom_call.1} parent=5 // pred_region
      %s908 = ssub.s32 %s9, 2
      // Predicated region
      $region55: #{tpu_custom_call.1} parent=53 // pred_check
        %p909 = pneg %p132
      $region56: #{tpu_custom_call.1} parent=53 // pred_check_branch
        %911 = sbr.rel (%p909) target = $region58
      $region57: #{tpu_custom_call.1} parent=53 // pred_region
        %p912 = scmp.lt.s32.totalorder %s20, 1
        %s913 = scalar_select %p912, %s20, 1
        %p914 = scmp.lt.s32.totalorder %s21, 0
        %s915 = scalar_select %p914, %s21, 0
        %s916 = smul.addr %s913, 32
        %s917 = sadd.s32 %s915, %s916
        %s918 = smul.addr %s917, 8
        %s919 = scalar_lea.vmem %s3, %s918
      $region58: #{tpu_custom_call.1} parent=53 // pred_fallthru
        _
    $region54: #{tpu_custom_call.1} parent=5 // pred_fallthru
      _
  $region6: #{tpu_custom_call.1} parent=0 // loop_footer
    %s13 = sadd.s32 1, %s9
  $region7: #{tpu_custom_call.1} parent=0 // loop_footer_branch
    %8 = sbr.rel target = $region3
  $region8: #{tpu_custom_call.1} parent=0 // loop_exit
    _

</llo_original>
